<compile_context>
chip_gen: v7x
topology: tpu7x:2x2x1
jax: 0.10.0
libtpu: 0.0.40
codegen_flags: <defaults>
</compile_context>

<pallas_src>
import functools

import jax
import jax.numpy as jnp
from jax.experimental import pallas as pl
from jax.experimental.pallas import tpu as pltpu

NEG_SLOPE = 0.01  # PyTorch LeakyReLU default


def _leaky_relu(x):
    # max(x, a*x) == LeakyReLU(x) for 0 < a < 1; saves one VALU op per element.
    return jnp.maximum(x, NEG_SLOPE * x)


def _choose_l_tiling(L, max_tile=8192):
    """Return (TL, L_pad): lane-axis tile and (possibly padded) L.

    TL is either the full L (always layout-legal) or a multiple of 128 that
    divides L_pad, so output stores stay unmasked / lane-dense and a single
    huge full-L block can never blow past v7x's 64 MiB VMEM.
    """
    if L <= max_tile:
        return L, L
    cands = [c for c in (16384, 8192, 4096, 2048, 1024, 512, 256, 128)
             if c <= max_tile]
    for c in cands:
        if L % c == 0:
            return c, L
    # Ragged large L: pad up to a multiple of 128, then tile.
    L_pad = ((L + 127) // 128) * 128
    for c in cands:
        if L_pad % c == 0:
            return c, L_pad
    return 128, L_pad


def _make_kernel(*, has_y, compute_dtype, epilogue_dtype):
    """Fused block-diagonal 3-layer MLP over one (batch, L-tile) slab."""

    def kernel(*refs):
        if has_y:
            (x_ref, y_ref, w1x_ref, w1y_ref, b1_ref, w2_ref, b2_ref,
             w3_ref, b3_ref, o_ref) = refs
        else:
            (x_ref, w1x_ref, b1_ref, w2_ref, b2_ref,
             w3_ref, b3_ref, o_ref) = refs
            y_ref = w1y_ref = None

        # Layer 1: block-diag W1 split by columns into x / y halves, so the
        # channel concat never materialises (the add stitches the boundary).
        acc = jnp.dot(w1x_ref[...], x_ref[...].astype(compute_dtype),
                      preferred_element_type=jnp.float32)
        if has_y:
            acc = acc + jnp.dot(w1y_ref[...], y_ref[...].astype(compute_dtype),
                                preferred_element_type=jnp.float32)
        h = acc.astype(epilogue_dtype) + b1_ref[...]
        h = _leaky_relu(h)

        # Layer 2: (tdim*hidden) x (tdim*hidden) block-diag -> near-native MXU tile.
        acc = jnp.dot(w2_ref[...], h.astype(compute_dtype),
                      preferred_element_type=jnp.float32)
        h = acc.astype(epilogue_dtype) + b2_ref[...]
        h = _leaky_relu(h)

        # nn.Dropout(p=0.1) is identity at inference (eval mode).
        # Layer 3: (tdim*spt_out, tdim*hidden); bias added in f32 on the way out.
        o = jnp.dot(w3_ref[...], h.astype(compute_dtype),
                    preferred_element_type=jnp.float32) + b3_ref[...]
        o_ref[...] = o.astype(o_ref.dtype)

    return kernel


def spatial_map_forward(x, y, params, *, tdim,
                        compute_dtype=jnp.bfloat16,
                        epilogue_dtype=None,
                        l_tile=None, max_l_tile=8192):
    """SpatialMap.forward: x, y (B, tdim*spt_in, L) -> (B, tdim, spt_out, L).

    params follow PyTorch nn.Linear layout: w (out_features, in_features),
    b (out_features,).  `compute_dtype` is the MXU operand dtype (bf16 native
    on v5e/v6e/v7x).  `epilogue_dtype` (bias + LeakyReLU) defaults to the
    compute dtype; pass jnp.float32 on v5e (no bf16 VALU).
    """
    w1, b1, w2, b2, w3, b3 = params
    if epilogue_dtype is None:
        epilogue_dtype = compute_dtype

    B, c_x, L = x.shape
    has_y = y is not None
    c_y = y.shape[1] if has_y else 0
    c_total = c_x + c_y
    assert c_total % tdim == 0, (c_total, tdim)
    f_in = c_total // tdim
    hidden = w1.shape[0]
    spt_out = w3.shape[0]
    assert w1.shape == (hidden, f_in) and w2.shape == (hidden, hidden)
    assert w3.shape == (spt_out, hidden)

    # --- L tiling (lane axis). ---
    if l_tile is not None:
        TL = l_tile
        L_pad = ((L + TL - 1) // TL) * TL
    else:
        TL, L_pad = _choose_l_tiling(L, max_tile=max_l_tile)
    n_l = L_pad // TL
    # NOTE: with B == 1 and n_l == 1 only a single grid step exists, so the
    # second v7x TensorCore idles; larger L (or batching) restores parallelism.

    # --- activations: cast to the MXU dtype in HBM (halves input DMA), pad ragged L. ---
    def prep(a):
        if a.dtype != compute_dtype:
            a = a.astype(compute_dtype)
        if L_pad != L:
            a = jnp.pad(a, ((0, 0), (0, 0), (0, L_pad - L)))
        return a

    x_in = prep(x)
    y_in = prep(y) if has_y else None

    # --- block-diagonalised weights (built once per call; tiny). ---
    eye = jnp.eye(tdim, dtype=jnp.float32)
    w1_blk = jnp.kron(eye, w1.astype(jnp.float32))   # (tdim*hidden, c_total)
    w2_blk = jnp.kron(eye, w2.astype(jnp.float32))   # (tdim*hidden, tdim*hidden)
    w3_blk = jnp.kron(eye, w3.astype(jnp.float32))   # (tdim*spt_out, tdim*hidden)
    w1x = w1_blk[:, :c_x].astype(compute_dtype)
    w1y = w1_blk[:, c_x:].astype(compute_dtype) if has_y else None
    w2c = w2_blk.astype(compute_dtype)
    w3c = w3_blk.astype(compute_dtype)
    b1c = jnp.tile(b1, tdim).reshape(tdim * hidden, 1).astype(epilogue_dtype)
    b2c = jnp.tile(b2, tdim).reshape(tdim * hidden, 1).astype(epilogue_dtype)
    b3c = jnp.tile(b3, tdim).reshape(tdim * spt_out, 1).astype(jnp.float32)

    kernel = _make_kernel(has_y=has_y, compute_dtype=compute_dtype,
                          epilogue_dtype=epilogue_dtype)

    def act_spec(channels):
        # (None, C, TL): batch squeezed, full channel dim, L tile on lanes.
        return pl.BlockSpec((None, channels, TL), lambda b, l: (b, 0, l))

    def full_spec(shape):
        return pl.BlockSpec(shape, lambda b, l: (0,) * len(shape))

    in_specs = [act_spec(c_x)]
    args = [x_in]
    if has_y:
        in_specs += [act_spec(c_y), full_spec(w1x.shape), full_spec(w1y.shape)]
        args += [y_in, w1x, w1y]
    else:
        in_specs += [full_spec(w1x.shape)]
        args += [w1x]
    in_specs += [full_spec(b1c.shape), full_spec(w2c.shape), full_spec(b2c.shape),
                 full_spec(w3c.shape), full_spec(b3c.shape)]
    args += [b1c, w2c, b2c, w3c, b3c]

    out_dtype = x.dtype
    # TODO(synk): emit a bf16 output here if downstream tolerates it (halves
    # output DMA too); kept at the input dtype for drop-in parity.
    out_spec = pl.BlockSpec((None, tdim * spt_out, TL), lambda b, l: (b, 0, l))

    flops = 2 * B * L_pad * tdim * (f_in * hidden + hidden * hidden + hidden * spt_out)
    bytes_io = (B * c_total * L_pad * jnp.dtype(compute_dtype).itemsize
                + B * tdim * spt_out * L_pad * jnp.dtype(out_dtype).itemsize
                + (w1x.size + (w1y.size if has_y else 0) + w2c.size + w3c.size)
                * jnp.dtype(compute_dtype).itemsize
                + (b1c.size + b2c.size) * jnp.dtype(epilogue_dtype).itemsize
                + b3c.size * 4)
    cost = pl.CostEstimate(flops=flops, transcendentals=0, bytes_accessed=bytes_io)

    out = pl.pallas_call(
        kernel,
        out_shape=jax.ShapeDtypeStruct((B, tdim * spt_out, L_pad), out_dtype),
        grid_spec=pl.GridSpec(grid=(B, n_l), in_specs=in_specs, out_specs=out_spec),
        compiler_params=pltpu.CompilerParams(
            dimension_semantics=("parallel", "parallel"),
            vmem_limit_bytes=32 * 1024 * 1024),
        cost_estimate=cost,
    )(*args)

    if L_pad != L:
        out = out[:, :, :L]
    # Metadata-only split of the contiguous channel axis -> (B, tdim, spt_out, L).
    return out.reshape(B, tdim, spt_out, L)


def init_params(key, f_in, hidden, f_out):
    """PyTorch-style Linear params: w (out, in), b (out,), U(-1/sqrt(fan_in), ...)."""
    ks = jax.random.split(key, 6)

    def lin(kw, kb, fan_in, fan_out):
        bound = 1.0 / jnp.sqrt(fan_in)
        w = jax.random.uniform(kw, (fan_out, fan_in), jnp.float32, -bound, bound)
        b = jax.random.uniform(kb, (fan_out,), jnp.float32, -bound, bound)
        return w, b

    w1, b1 = lin(ks[0], ks[1], f_in, hidden)
    w2, b2 = lin(ks[2], ks[3], hidden, hidden)
    w3, b3 = lin(ks[4], ks[5], hidden, f_out)
    return (w1, b1, w2, b2, w3, b3)


def reference_forward(x, y, params, *, tdim):
    """Pure-JAX f32 reference mirroring the PyTorch module exactly."""
    w1, b1, w2, b2, w3, b3 = params
    if y is not None:
        x = jnp.concatenate((x, y), axis=1)
    B, D1, L = x.shape
    h = jnp.transpose(x, (0, 2, 1)).reshape(B, L, tdim, D1 // tdim)
    h = jnp.maximum(h @ w1.T + b1, NEG_SLOPE * (h @ w1.T + b1))
    h = jnp.maximum(h @ w2.T + b2, NEG_SLOPE * (h @ w2.T + b2))
    o = h @ w3.T + b3
    return jnp.transpose(o, (0, 2, 3, 1))


if __name__ == "__main__":
    # Module config (small, synthetic):
    spt_in = 4
    spt_out = 8
    tdim = 4
    dbl = True
    hidden_dim = 64   # create_mapper hidden_dim

    B = 2
    L = 16            # trailing axis of the NCL input

    f_in = (dbl + 1) * spt_in  # 8

    key = jax.random.PRNGKey(0)
    kx, ky, kp = jax.random.split(key, 3)
    x = jax.random.normal(kx, (B, tdim * spt_in, L), jnp.float32)
    y = jax.random.normal(ky, (B, tdim * spt_in, L), jnp.float32)
    params = init_params(kp, f_in, hidden_dim, spt_out)

    ref = reference_forward(x, y, params, tdim=tdim)

    # f32 compute + f32 epilogue: tight semantic check of the fused kernel.
    fwd_f32 = jax.jit(functools.partial(
        spatial_map_forward, tdim=tdim,
        compute_dtype=jnp.float32, epilogue_dtype=jnp.float32))
    out_f32 = jax.block_until_ready(fwd_f32(x, y, params))
    assert out_f32.shape == (B, tdim, spt_out, L), out_f32.shape
    assert jnp.allclose(out_f32, ref, atol=2e-4, rtol=2e-4), \
        float(jnp.max(jnp.abs(out_f32 - ref)))

    # Default fast path: bf16 I/O + bf16 MXU + bf16 epilogue (v6e/v7x native).
    fwd_bf16 = jax.jit(functools.partial(
        spatial_map_forward, tdim=tdim, compute_dtype=jnp.bfloat16))
    out_bf16 = jax.block_until_ready(fwd_bf16(x, y, params))
    assert out_bf16.shape == (B, tdim, spt_out, L), out_bf16.shape
    assert jnp.allclose(out_bf16, ref, atol=5e-2, rtol=5e-2), \
        float(jnp.max(jnp.abs(out_bf16 - ref)))

    print("KERNEL_OK")
</pallas_src>

<mosaic_0001>
module attributes {stable_mosaic.version = 11 : i64} {
  func.func @kernel(%arg0: i32, %arg1: i32, %arg2: memref<1x16x16xf32, #tpu.memory_space<vmem>>, %arg3: memref<1x16x16xf32, #tpu.memory_space<vmem>>, %arg4: memref<256x16xf32, #tpu.memory_space<vmem>>, %arg5: memref<256x16xf32, #tpu.memory_space<vmem>>, %arg6: memref<256x1xf32, #tpu.memory_space<vmem>>, %arg7: memref<256x256xf32, #tpu.memory_space<vmem>>, %arg8: memref<256x1xf32, #tpu.memory_space<vmem>>, %arg9: memref<32x256xf32, #tpu.memory_space<vmem>>, %arg10: memref<32x1xf32, #tpu.memory_space<vmem>>, %arg11: memref<1x32x16xf32, #tpu.memory_space<vmem>>) attributes {dimension_semantics = [#tpu.dimension_semantics<parallel>, #tpu.dimension_semantics<parallel>], iteration_bounds = array<i64: 2, 1>, scalar_prefetch = 0 : i64, scratch_operands = 0 : i64, tpu.core_type = #tpu.core_type<tc>, window_params = [{transform_indices = @transform_0, window_bounds = array<i64: 1, 16, 16>}, {transform_indices = @transform_1, window_bounds = array<i64: 1, 16, 16>}, {pipeline_mode = #tpu.pipeline_mode<synchronous>, transform_indices = @transform_2, window_bounds = array<i64: 256, 16>}, {pipeline_mode = #tpu.pipeline_mode<synchronous>, transform_indices = @transform_3, window_bounds = array<i64: 256, 16>}, {pipeline_mode = #tpu.pipeline_mode<synchronous>, transform_indices = @transform_4, window_bounds = array<i64: 256, 1>}, {pipeline_mode = #tpu.pipeline_mode<synchronous>, transform_indices = @transform_5, window_bounds = array<i64: 256, 256>}, {pipeline_mode = #tpu.pipeline_mode<synchronous>, transform_indices = @transform_6, window_bounds = array<i64: 256, 1>}, {pipeline_mode = #tpu.pipeline_mode<synchronous>, transform_indices = @transform_7, window_bounds = array<i64: 32, 256>}, {pipeline_mode = #tpu.pipeline_mode<synchronous>, transform_indices = @transform_8, window_bounds = array<i64: 32, 1>}, {transform_indices = @transform_9, window_bounds = array<i64: 1, 32, 16>}]} {
    %c0 = arith.constant 0 : index
    %c0_0 = arith.constant 0 : index
    %0 = vector.load %arg4[%c0, %c0_0] : memref<256x16xf32, #tpu.memory_space<vmem>>, vector<256x16xf32>
    %c0_1 = arith.constant 0 : index
    %c0_2 = arith.constant 0 : index
    %c0_3 = arith.constant 0 : index
    %1 = vector.load %arg2[%c0_1, %c0_2, %c0_3] : memref<1x16x16xf32, #tpu.memory_space<vmem>>, vector<1x16x16xf32>
    %2 = vector.shape_cast %1 : vector<1x16x16xf32> to vector<16x16xf32>
    %cst = arith.constant dense<0.000000e+00> : vector<256x16xf32>
    %3 = tpu.matmul %0, %2, %cst {dimension_numbers = #tpu.dot_dimension_numbers<[1], [0], [0], [1], [0, 0, 1, 1], [], []>} : vector<256x16xf32>, vector<16x16xf32>, vector<256x16xf32> -> vector<256x16xf32>
    %c0_4 = arith.constant 0 : index
    %c0_5 = arith.constant 0 : index
    %4 = vector.load %arg5[%c0_4, %c0_5] : memref<256x16xf32, #tpu.memory_space<vmem>>, vector<256x16xf32>
    %c0_6 = arith.constant 0 : index
    %c0_7 = arith.constant 0 : index
    %c0_8 = arith.constant 0 : index
    %5 = vector.load %arg3[%c0_6, %c0_7, %c0_8] : memref<1x16x16xf32, #tpu.memory_space<vmem>>, vector<1x16x16xf32>
    %6 = vector.shape_cast %5 : vector<1x16x16xf32> to vector<16x16xf32>
    %cst_9 = arith.constant dense<0.000000e+00> : vector<256x16xf32>
    %7 = tpu.matmul %4, %6, %cst_9 {dimension_numbers = #tpu.dot_dimension_numbers<[1], [0], [0], [1], [0, 0, 1, 1], [], []>} : vector<256x16xf32>, vector<16x16xf32>, vector<256x16xf32> -> vector<256x16xf32>
    %8 = arith.addf %3, %7 : vector<256x16xf32>
    %c0_10 = arith.constant 0 : index
    %c0_11 = arith.constant 0 : index
    %9 = vector.load %arg6[%c0_10, %c0_11] : memref<256x1xf32, #tpu.memory_space<vmem>>, vector<256x1xf32>
    %10 = vector.broadcast %9 : vector<256x1xf32> to vector<256x16xf32>
    %11 = arith.addf %8, %10 : vector<256x16xf32>
    %cst_12 = arith.constant 0.00999999977 : f32
    %12 = vector.broadcast %cst_12 : f32 to vector<256x16xf32>
    %13 = arith.mulf %12, %11 : vector<256x16xf32>
    %14 = arith.maximumf %11, %13 : vector<256x16xf32>
    %c0_13 = arith.constant 0 : index
    %c0_14 = arith.constant 0 : index
    %15 = vector.load %arg7[%c0_13, %c0_14] : memref<256x256xf32, #tpu.memory_space<vmem>>, vector<256x256xf32>
    %cst_15 = arith.constant dense<0.000000e+00> : vector<256x16xf32>
    %16 = tpu.matmul %15, %14, %cst_15 {dimension_numbers = #tpu.dot_dimension_numbers<[1], [0], [0], [1], [0, 0, 1, 1], [], []>} : vector<256x256xf32>, vector<256x16xf32>, vector<256x16xf32> -> vector<256x16xf32>
    %c0_16 = arith.constant 0 : index
    %c0_17 = arith.constant 0 : index
    %17 = vector.load %arg8[%c0_16, %c0_17] : memref<256x1xf32, #tpu.memory_space<vmem>>, vector<256x1xf32>
    %18 = vector.broadcast %17 : vector<256x1xf32> to vector<256x16xf32>
    %19 = arith.addf %16, %18 : vector<256x16xf32>
    %cst_18 = arith.constant 0.00999999977 : f32
    %20 = vector.broadcast %cst_18 : f32 to vector<256x16xf32>
    %21 = arith.mulf %20, %19 : vector<256x16xf32>
    %22 = arith.maximumf %19, %21 : vector<256x16xf32>
    %c0_19 = arith.constant 0 : index
    %c0_20 = arith.constant 0 : index
    %23 = vector.load %arg9[%c0_19, %c0_20] : memref<32x256xf32, #tpu.memory_space<vmem>>, vector<32x256xf32>
    %cst_21 = arith.constant dense<0.000000e+00> : vector<32x16xf32>
    %24 = tpu.matmul %23, %22, %cst_21 {dimension_numbers = #tpu.dot_dimension_numbers<[1], [0], [0], [1], [0, 0, 1, 1], [], []>} : vector<32x256xf32>, vector<256x16xf32>, vector<32x16xf32> -> vector<32x16xf32>
    %c0_22 = arith.constant 0 : index
    %c0_23 = arith.constant 0 : index
    %25 = vector.load %arg10[%c0_22, %c0_23] : memref<32x1xf32, #tpu.memory_space<vmem>>, vector<32x1xf32>
    %26 = vector.broadcast %25 : vector<32x1xf32> to vector<32x16xf32>
    %27 = arith.addf %24, %26 : vector<32x16xf32>
    %c0_24 = arith.constant 0 : index
    %c0_25 = arith.constant 0 : index
    %c0_26 = arith.constant 0 : index
    %28 = vector.load %arg11[%c0_24, %c0_25, %c0_26] : memref<1x32x16xf32, #tpu.memory_space<vmem>>, vector<1x32x16xf32>
    %29 = vector.shape_cast %28 : vector<1x32x16xf32> to vector<32x16xf32>
    %30 = vector.shape_cast %27 : vector<32x16xf32> to vector<1x32x16xf32>
    tpu.vector_store %arg11[%c0_24, %c0_25, %c0_26], %30 {strides = array<i32>} : memref<1x32x16xf32, #tpu.memory_space<vmem>>, vector<1x32x16xf32>,
    return
  }
  func.func @transform_0(%arg0: i32, %arg1: i32) -> (i32, i32, i32) {
    %c0_i32 = arith.constant 0 : i32
    %c0_i32_0 = arith.constant 0 : i32
    return %arg0, %c0_i32, %arg1 : i32, i32, i32
  }
  func.func @transform_1(%arg0: i32, %arg1: i32) -> (i32, i32, i32) {
    %c0_i32 = arith.constant 0 : i32
    %c0_i32_0 = arith.constant 0 : i32
    return %arg0, %c0_i32, %arg1 : i32, i32, i32
  }
  func.func @transform_2(%arg0: i32, %arg1: i32) -> (i32, i32) {
    %c0_i32 = arith.constant 0 : i32
    %c0_i32_0 = arith.constant 0 : i32
    %c0_i32_1 = arith.constant 0 : i32
    return %c0_i32, %c0_i32_0 : i32, i32
  }
  func.func @transform_3(%arg0: i32, %arg1: i32) -> (i32, i32) {
    %c0_i32 = arith.constant 0 : i32
    %c0_i32_0 = arith.constant 0 : i32
    %c0_i32_1 = arith.constant 0 : i32
    return %c0_i32, %c0_i32_0 : i32, i32
  }
  func.func @transform_4(%arg0: i32, %arg1: i32) -> (i32, i32) {
    %c0_i32 = arith.constant 0 : i32
    %c0_i32_0 = arith.constant 0 : i32
    %c0_i32_1 = arith.constant 0 : i32
    return %c0_i32, %c0_i32_0 : i32, i32
  }
  func.func @transform_5(%arg0: i32, %arg1: i32) -> (i32, i32) {
    %c0_i32 = arith.constant 0 : i32
    %c0_i32_0 = arith.constant 0 : i32
    %c0_i32_1 = arith.constant 0 : i32
    return %c0_i32, %c0_i32_0 : i32, i32
  }
  func.func @transform_6(%arg0: i32, %arg1: i32) -> (i32, i32) {
    %c0_i32 = arith.constant 0 : i32
    %c0_i32_0 = arith.constant 0 : i32
    %c0_i32_1 = arith.constant 0 : i32
    return %c0_i32, %c0_i32_0 : i32, i32
  }
  func.func @transform_7(%arg0: i32, %arg1: i32) -> (i32, i32) {
    %c0_i32 = arith.constant 0 : i32
    %c0_i32_0 = arith.constant 0 : i32
    %c0_i32_1 = arith.constant 0 : i32
    return %c0_i32, %c0_i32_0 : i32, i32
  }
  func.func @transform_8(%arg0: i32, %arg1: i32) -> (i32, i32) {
    %c0_i32 = arith.constant 0 : i32
    %c0_i32_0 = arith.constant 0 : i32
    %c0_i32_1 = arith.constant 0 : i32
    return %c0_i32, %c0_i32_0 : i32, i32
  }
  func.func @transform_9(%arg0: i32, %arg1: i32) -> (i32, i32, i32) {
    %c0_i32 = arith.constant 0 : i32
    %c0_i32_0 = arith.constant 0 : i32
    return %arg0, %c0_i32, %arg1 : i32, i32, i32
  }
}

</mosaic_0001>

<llo_original>
// kernel: tile.18
$region0: #{tile.18}
  #allocation0 [shape = 's32[1]{0}', space=sflag, size = 0x4, scoped, tag = 'scoped memory for tile.18']
  %s0 = inlined_call_operand.vmem [shape: f32[64], index: 0, kind: input, shape index: {}]
  %s1 = inlined_call_operand.vmem [shape: f32[4,64], index: 1, kind: output, shape index: {}]
  // Predicated region
  $region2: #{tile.18} parent=0 // pred_check
    _
  $region3: #{tile.18} parent=0 // pred_check_branch
    %3 = sbr.rel (0) target = $region5
  $region4: #{tile.18} parent=0 // pred_region
    _
  $region5: #{tile.18} parent=0 // pred_fallthru
    _
  %v4 = vld [vmem:[%s0] ss:$0 sm:$0xff]
  %5 = vst [vmem:[%s1] sm:$0xf] %v4

// kernel: tile.28
$region0: #{tile.28}
  #allocation0 [shape = 's32[1]{0}', space=sflag, size = 0x4, scoped, tag = 'scoped memory for tile.28']
  %s0 = inlined_call_operand.vmem [shape: f32[8], index: 0, kind: input, shape index: {}]
  %s1 = inlined_call_operand.vmem [shape: f32[4,8], index: 1, kind: output, shape index: {}]
  // Predicated region
  $region2: #{tile.28} parent=0 // pred_check
    _
  $region3: #{tile.28} parent=0 // pred_check_branch
    %3 = sbr.rel (0) target = $region5
  $region4: #{tile.28} parent=0 // pred_region
    _
  $region5: #{tile.28} parent=0 // pred_fallthru
    _
  %v4 = vld [vmem:[%s0] ss:$0 sm:$0xff]
  %5 = vst [vmem:[%s1] sm:$0xf] %v4

// kernel: tile.0
$region0: #{tile.0}
  %s0 = inlined_call_operand.vmem [shape: f32[4,64], index: 0, kind: input, shape index: {}]
  %s1 = inlined_call_operand.vmem [shape: f32[256,1], index: 1, kind: output, shape index: {}]
  $region1: #{tile.0} parent=0
    #allocation0 [shape = 'u8[4096]{0}', space=vmem, size = 0x1000, scoped, tag = 'scoped mem for input reshape']
    %s3 = sshllo.u32 0, 4
    %v4 = vld [vmem:[%s0] sm:%s3]
    %5 = vst [vmem:[#allocation0] sm:%s3] %v4
    %v6 = vld [vmem:[#allocation0] sm:$0xf]
    %vm7 = vcmask 7168
    %8 = vst.msk [vmem:[%s1] sm:$0x1] %vm7, %v6
    %s9 = scalar_lea.vmem %s1, 63
    %10 = vst.msk [vmem:[%s9] sm:$0x2] %vm7, %v6
    %s11 = scalar_lea.vmem %s1, 126
    %12 = vst.msk [vmem:[%s11] sm:$0x4] %vm7, %v6
    %s13 = scalar_lea.vmem %s1, 189
    %14 = vst.msk [vmem:[%s13] sm:$0x8] %vm7, %v6
    %v15 = vld [vmem:[#allocation0] sm:$0xf]
    %16 = vrot.lane.b32.xlu0 %v15, 127
    %v17 = vpop.permute.xlu0 %16
    %vm18 = vcmask 7168
    %s19 = scalar_lea.vmem %s1, 1
    %20 = vst.msk [vmem:[%s19] sm:$0x1] %vm18, %v17
    %s21 = scalar_lea.vmem %s1, 64
    %22 = vst.msk [vmem:[%s21] sm:$0x2] %vm18, %v17
    %s23 = scalar_lea.vmem %s1, 127
    %24 = vst.msk [vmem:[%s23] sm:$0x4] %vm18, %v17
    %s25 = scalar_lea.vmem %s1, 190
    %26 = vst.msk [vmem:[%s25] sm:$0x8] %vm18, %v17
    %v27 = vld [vmem:[#allocation0] sm:$0xf]
    %28 = vrot.lane.b32.xlu0 %v27, 126
    %v29 = vpop.permute.xlu0 %28
    %vm30 = vcmask 7168
    %s31 = scalar_lea.vmem %s1, 2
    %32 = vst.msk [vmem:[%s31] sm:$0x1] %vm30, %v29
    %s33 = scalar_lea.vmem %s1, 65
    %34 = vst.msk [vmem:[%s33] sm:$0x2] %vm30, %v29
    %s35 = scalar_lea.vmem %s1, 128
    %36 = vst.msk [vmem:[%s35] sm:$0x4] %vm30, %v29
    %s37 = scalar_lea.vmem %s1, 191
    %38 = vst.msk [vmem:[%s37] sm:$0x8] %vm30, %v29
    %v39 = vld [vmem:[#allocation0] sm:$0xf]
    %40 = vrot.lane.b32.xlu0 %v39, 125
    %v41 = vpop.permute.xlu0 %40
    %vm42 = vcmask 7168
    %s43 = scalar_lea.vmem %s1, 3
    %44 = vst.msk [vmem:[%s43] sm:$0x1] %vm42, %v41
    %s45 = scalar_lea.vmem %s1, 66
    %46 = vst.msk [vmem:[%s45] sm:$0x2] %vm42, %v41
    %s47 = scalar_lea.vmem %s1, 129
    %48 = vst.msk [vmem:[%s47] sm:$0x4] %vm42, %v41
    %s49 = scalar_lea.vmem %s1, 192
    %50 = vst.msk [vmem:[%s49] sm:$0x8] %vm42, %v41
    %v51 = vld [vmem:[#allocation0] sm:$0xf]
    %52 = vrot.lane.b32.xlu0 %v51, 124
    %v53 = vpop.permute.xlu0 %52
    %vm54 = vcmask 7168
    %s55 = scalar_lea.vmem %s1, 4
    %56 = vst.msk [vmem:[%s55] sm:$0x1] %vm54, %v53
    %s57 = scalar_lea.vmem %s1, 67
    %58 = vst.msk [vmem:[%s57] sm:$0x2] %vm54, %v53
    %s59 = scalar_lea.vmem %s1, 130
    %60 = vst.msk [vmem:[%s59] sm:$0x4] %vm54, %v53
    %s61 = scalar_lea.vmem %s1, 193
    %62 = vst.msk [vmem:[%s61] sm:$0x8] %vm54, %v53
    %v63 = vld [vmem:[#allocation0] sm:$0xf]
    %64 = vrot.lane.b32.xlu0 %v63, 123
    %v65 = vpop.permute.xlu0 %64
    %vm66 = vcmask 7168
    %s67 = scalar_lea.vmem %s1, 5
    %68 = vst.msk [vmem:[%s67] sm:$0x1] %vm66, %v65
    %s69 = scalar_lea.vmem %s1, 68
    %70 = vst.msk [vmem:[%s69] sm:$0x2] %vm66, %v65
    %s71 = scalar_lea.vmem %s1, 131
    %72 = vst.msk [vmem:[%s71] sm:$0x4] %vm66, %v65
    %s73 = scalar_lea.vmem %s1, 194
    %74 = vst.msk [vmem:[%s73] sm:$0x8] %vm66, %v65
    %v75 = vld [vmem:[#allocation0] sm:$0xf]
    %76 = vrot.lane.b32.xlu0 %v75, 122
    %v77 = vpop.permute.xlu0 %76
    %vm78 = vcmask 7168
    %s79 = scalar_lea.vmem %s1, 6
    %80 = vst.msk [vmem:[%s79] sm:$0x1] %vm78, %v77
    %s81 = scalar_lea.vmem %s1, 69
    %82 = vst.msk [vmem:[%s81] sm:$0x2] %vm78, %v77
    %s83 = scalar_lea.vmem %s1, 132
    %84 = vst.msk [vmem:[%s83] sm:$0x4] %vm78, %v77
    %s85 = scalar_lea.vmem %s1, 195
    %86 = vst.msk [vmem:[%s85] sm:$0x8] %vm78, %v77
    %v87 = vld [vmem:[#allocation0] sm:$0xf]
    %88 = vrot.lane.b32.xlu0 %v87, 121
    %v89 = vpop.permute.xlu0 %88
    %vm90 = vcmask 7168
    %s91 = scalar_lea.vmem %s1, 7
    %92 = vst.msk [vmem:[%s91] sm:$0x1] %vm90, %v89
    %s93 = scalar_lea.vmem %s1, 70
    %94 = vst.msk [vmem:[%s93] sm:$0x2] %vm90, %v89
    %s95 = scalar_lea.vmem %s1, 133
    %96 = vst.msk [vmem:[%s95] sm:$0x4] %vm90, %v89
    %s97 = scalar_lea.vmem %s1, 196
    %98 = vst.msk [vmem:[%s97] sm:$0x8] %vm90, %v89
    %v99 = vld [vmem:[#allocation0] sm:$0xf]
    %100 = vrot.lane.b32.xlu0 %v99, 120
    %v101 = vpop.permute.xlu0 %100
    %vm102 = vcmask 7168
    %s103 = scalar_lea.vmem %s1, 8
    %104 = vst.msk [vmem:[%s103] sm:$0x1] %vm102, %v101
    %s105 = scalar_lea.vmem %s1, 71
    %106 = vst.msk [vmem:[%s105] sm:$0x2] %vm102, %v101
    %s107 = scalar_lea.vmem %s1, 134
    %108 = vst.msk [vmem:[%s107] sm:$0x4] %vm102, %v101
    %s109 = scalar_lea.vmem %s1, 197
    %110 = vst.msk [vmem:[%s109] sm:$0x8] %vm102, %v101
    %v111 = vld [vmem:[#allocation0] sm:$0xf]
    %112 = vrot.lane.b32.xlu0 %v111, 119
    %v113 = vpop.permute.xlu0 %112
    %vm114 = vcmask 7168
    %s115 = scalar_lea.vmem %s1, 9
    %116 = vst.msk [vmem:[%s115] sm:$0x1] %vm114, %v113
    %s117 = scalar_lea.vmem %s1, 72
    %118 = vst.msk [vmem:[%s117] sm:$0x2] %vm114, %v113
    %s119 = scalar_lea.vmem %s1, 135
    %120 = vst.msk [vmem:[%s119] sm:$0x4] %vm114, %v113
    %s121 = scalar_lea.vmem %s1, 198
    %122 = vst.msk [vmem:[%s121] sm:$0x8] %vm114, %v113
    %v123 = vld [vmem:[#allocation0] sm:$0xf]
    %124 = vrot.lane.b32.xlu0 %v123, 118
    %v125 = vpop.permute.xlu0 %124
    %vm126 = vcmask 7168
    %s127 = scalar_lea.vmem %s1, 10
    %128 = vst.msk [vmem:[%s127] sm:$0x1] %vm126, %v125
    %s129 = scalar_lea.vmem %s1, 73
    %130 = vst.msk [vmem:[%s129] sm:$0x2] %vm126, %v125
    %s131 = scalar_lea.vmem %s1, 136
    %132 = vst.msk [vmem:[%s131] sm:$0x4] %vm126, %v125
    %s133 = scalar_lea.vmem %s1, 199
    %134 = vst.msk [vmem:[%s133] sm:$0x8] %vm126, %v125
    %v135 = vld [vmem:[#allocation0] sm:$0xf]
    %136 = vrot.lane.b32.xlu0 %v135, 117
    %v137 = vpop.permute.xlu0 %136
    %vm138 = vcmask 7168
    %s139 = scalar_lea.vmem %s1, 11
    %140 = vst.msk [vmem:[%s139] sm:$0x1] %vm138, %v137
    %s141 = scalar_lea.vmem %s1, 74
    %142 = vst.msk [vmem:[%s141] sm:$0x2] %vm138, %v137
    %s143 = scalar_lea.vmem %s1, 137
    %144 = vst.msk [vmem:[%s143] sm:$0x4] %vm138, %v137
    %s145 = scalar_lea.vmem %s1, 200
    %146 = vst.msk [vmem:[%s145] sm:$0x8] %vm138, %v137
    %v147 = vld [vmem:[#allocation0] sm:$0xf]
    %148 = vrot.lane.b32.xlu0 %v147, 116
    %v149 = vpop.permute.xlu0 %148
    %vm150 = vcmask 7168
    %s151 = scalar_lea.vmem %s1, 12
    %152 = vst.msk [vmem:[%s151] sm:$0x1] %vm150, %v149
    %s153 = scalar_lea.vmem %s1, 75
    %154 = vst.msk [vmem:[%s153] sm:$0x2] %vm150, %v149
    %s155 = scalar_lea.vmem %s1, 138
    %156 = vst.msk [vmem:[%s155] sm:$0x4] %vm150, %v149
    %s157 = scalar_lea.vmem %s1, 201
    %158 = vst.msk [vmem:[%s157] sm:$0x8] %vm150, %v149
    %v159 = vld [vmem:[#allocation0] sm:$0xf]
    %160 = vrot.lane.b32.xlu0 %v159, 115
    %v161 = vpop.permute.xlu0 %160
    %vm162 = vcmask 7168
    %s163 = scalar_lea.vmem %s1, 13
    %164 = vst.msk [vmem:[%s163] sm:$0x1] %vm162, %v161
    %s165 = scalar_lea.vmem %s1, 76
    %166 = vst.msk [vmem:[%s165] sm:$0x2] %vm162, %v161
    %s167 = scalar_lea.vmem %s1, 139
    %168 = vst.msk [vmem:[%s167] sm:$0x4] %vm162, %v161
    %s169 = scalar_lea.vmem %s1, 202
    %170 = vst.msk [vmem:[%s169] sm:$0x8] %vm162, %v161
    %v171 = vld [vmem:[#allocation0] sm:$0xf]
    %172 = vrot.lane.b32.xlu0 %v171, 114
    %v173 = vpop.permute.xlu0 %172
    %vm174 = vcmask 7168
    %s175 = scalar_lea.vmem %s1, 14
    %176 = vst.msk [vmem:[%s175] sm:$0x1] %vm174, %v173
    %s177 = scalar_lea.vmem %s1, 77
    %178 = vst.msk [vmem:[%s177] sm:$0x2] %vm174, %v173
    %s179 = scalar_lea.vmem %s1, 140
    %180 = vst.msk [vmem:[%s179] sm:$0x4] %vm174, %v173
    %s181 = scalar_lea.vmem %s1, 203
    %182 = vst.msk [vmem:[%s181] sm:$0x8] %vm174, %v173
    %v183 = vld [vmem:[#allocation0] sm:$0xf]
    %184 = vrot.lane.b32.xlu0 %v183, 113
    %v185 = vpop.permute.xlu0 %184
    %vm186 = vcmask 7168
    %s187 = scalar_lea.vmem %s1, 15
    %188 = vst.msk [vmem:[%s187] sm:$0x1] %vm186, %v185
    %s189 = scalar_lea.vmem %s1, 78
    %190 = vst.msk [vmem:[%s189] sm:$0x2] %vm186, %v185
    %s191 = scalar_lea.vmem %s1, 141
    %192 = vst.msk [vmem:[%s191] sm:$0x4] %vm186, %v185
    %s193 = scalar_lea.vmem %s1, 204
    %194 = vst.msk [vmem:[%s193] sm:$0x8] %vm186, %v185
    %v195 = vld [vmem:[#allocation0] sm:$0xf]
    %196 = vrot.lane.b32.xlu0 %v195, 112
    %v197 = vpop.permute.xlu0 %196
    %vm198 = vcmask 7168
    %s199 = scalar_lea.vmem %s1, 16
    %200 = vst.msk [vmem:[%s199] sm:$0x1] %vm198, %v197
    %s201 = scalar_lea.vmem %s1, 79
    %202 = vst.msk [vmem:[%s201] sm:$0x2] %vm198, %v197
    %s203 = scalar_lea.vmem %s1, 142
    %204 = vst.msk [vmem:[%s203] sm:$0x4] %vm198, %v197
    %s205 = scalar_lea.vmem %s1, 205
    %206 = vst.msk [vmem:[%s205] sm:$0x8] %vm198, %v197
    %v207 = vld [vmem:[#allocation0] sm:$0xf]
    %208 = vrot.lane.b32.xlu0 %v207, 111
    %v209 = vpop.permute.xlu0 %208
    %vm210 = vcmask 7168
    %s211 = scalar_lea.vmem %s1, 17
    %212 = vst.msk [vmem:[%s211] sm:$0x1] %vm210, %v209
    %s213 = scalar_lea.vmem %s1, 80
    %214 = vst.msk [vmem:[%s213] sm:$0x2] %vm210, %v209
    %s215 = scalar_lea.vmem %s1, 143
    %216 = vst.msk [vmem:[%s215] sm:$0x4] %vm210, %v209
    %s217 = scalar_lea.vmem %s1, 206
    %218 = vst.msk [vmem:[%s217] sm:$0x8] %vm210, %v209
    %v219 = vld [vmem:[#allocation0] sm:$0xf]
    %220 = vrot.lane.b32.xlu0 %v219, 110
    %v221 = vpop.permute.xlu0 %220
    %vm222 = vcmask 7168
    %s223 = scalar_lea.vmem %s1, 18
    %224 = vst.msk [vmem:[%s223] sm:$0x1] %vm222, %v221
    %s225 = scalar_lea.vmem %s1, 81
    %226 = vst.msk [vmem:[%s225] sm:$0x2] %vm222, %v221
    %s227 = scalar_lea.vmem %s1, 144
    %228 = vst.msk [vmem:[%s227] sm:$0x4] %vm222, %v221
    %s229 = scalar_lea.vmem %s1, 207
    %230 = vst.msk [vmem:[%s229] sm:$0x8] %vm222, %v221
    %v231 = vld [vmem:[#allocation0] sm:$0xf]
    %232 = vrot.lane.b32.xlu0 %v231, 109
    %v233 = vpop.permute.xlu0 %232
    %vm234 = vcmask 7168
    %s235 = scalar_lea.vmem %s1, 19
    %236 = vst.msk [vmem:[%s235] sm:$0x1] %vm234, %v233
    %s237 = scalar_lea.vmem %s1, 82
    %238 = vst.msk [vmem:[%s237] sm:$0x2] %vm234, %v233
    %s239 = scalar_lea.vmem %s1, 145
    %240 = vst.msk [vmem:[%s239] sm:$0x4] %vm234, %v233
    %s241 = scalar_lea.vmem %s1, 208
    %242 = vst.msk [vmem:[%s241] sm:$0x8] %vm234, %v233
    %v243 = vld [vmem:[#allocation0] sm:$0xf]
    %244 = vrot.lane.b32.xlu0 %v243, 108
    %v245 = vpop.permute.xlu0 %244
    %vm246 = vcmask 7168
    %s247 = scalar_lea.vmem %s1, 20
    %248 = vst.msk [vmem:[%s247] sm:$0x1] %vm246, %v245
    %s249 = scalar_lea.vmem %s1, 83
    %250 = vst.msk [vmem:[%s249] sm:$0x2] %vm246, %v245
    %s251 = scalar_lea.vmem %s1, 146
    %252 = vst.msk [vmem:[%s251] sm:$0x4] %vm246, %v245
    %s253 = scalar_lea.vmem %s1, 209
    %254 = vst.msk [vmem:[%s253] sm:$0x8] %vm246, %v245
    %v255 = vld [vmem:[#allocation0] sm:$0xf]
    %256 = vrot.lane.b32.xlu0 %v255, 107
    %v257 = vpop.permute.xlu0 %256
    %vm258 = vcmask 7168
    %s259 = scalar_lea.vmem %s1, 21
    %260 = vst.msk [vmem:[%s259] sm:$0x1] %vm258, %v257
    %s261 = scalar_lea.vmem %s1, 84
    %262 = vst.msk [vmem:[%s261] sm:$0x2] %vm258, %v257
    %s263 = scalar_lea.vmem %s1, 147
    %264 = vst.msk [vmem:[%s263] sm:$0x4] %vm258, %v257
    %s265 = scalar_lea.vmem %s1, 210
    %266 = vst.msk [vmem:[%s265] sm:$0x8] %vm258, %v257
    %v267 = vld [vmem:[#allocation0] sm:$0xf]
    %268 = vrot.lane.b32.xlu0 %v267, 106
    %v269 = vpop.permute.xlu0 %268
    %vm270 = vcmask 7168
    %s271 = scalar_lea.vmem %s1, 22
    %272 = vst.msk [vmem:[%s271] sm:$0x1] %vm270, %v269
    %s273 = scalar_lea.vmem %s1, 85
    %274 = vst.msk [vmem:[%s273] sm:$0x2] %vm270, %v269
    %s275 = scalar_lea.vmem %s1, 148
    %276 = vst.msk [vmem:[%s275] sm:$0x4] %vm270, %v269
    %s277 = scalar_lea.vmem %s1, 211
    %278 = vst.msk [vmem:[%s277] sm:$0x8] %vm270, %v269
    %v279 = vld [vmem:[#allocation0] sm:$0xf]
    %280 = vrot.lane.b32.xlu0 %v279, 105
    %v281 = vpop.permute.xlu0 %280
    %vm282 = vcmask 7168
    %s283 = scalar_lea.vmem %s1, 23
    %284 = vst.msk [vmem:[%s283] sm:$0x1] %vm282, %v281
    %s285 = scalar_lea.vmem %s1, 86
    %286 = vst.msk [vmem:[%s285] sm:$0x2] %vm282, %v281
    %s287 = scalar_lea.vmem %s1, 149
    %288 = vst.msk [vmem:[%s287] sm:$0x4] %vm282, %v281
    %s289 = scalar_lea.vmem %s1, 212
    %290 = vst.msk [vmem:[%s289] sm:$0x8] %vm282, %v281
    %v291 = vld [vmem:[#allocation0] sm:$0xf]
    %292 = vrot.lane.b32.xlu0 %v291, 104
    %v293 = vpop.permute.xlu0 %292
    %vm294 = vcmask 7168
    %s295 = scalar_lea.vmem %s1, 24
    %296 = vst.msk [vmem:[%s295] sm:$0x1] %vm294, %v293
    %s297 = scalar_lea.vmem %s1, 87
    %298 = vst.msk [vmem:[%s297] sm:$0x2] %vm294, %v293
    %s299 = scalar_lea.vmem %s1, 150
    %300 = vst.msk [vmem:[%s299] sm:$0x4] %vm294, %v293
    %s301 = scalar_lea.vmem %s1, 213
    %302 = vst.msk [vmem:[%s301] sm:$0x8] %vm294, %v293
    %v303 = vld [vmem:[#allocation0] sm:$0xf]
    %304 = vrot.lane.b32.xlu0 %v303, 103
    %v305 = vpop.permute.xlu0 %304
    %vm306 = vcmask 7168
    %s307 = scalar_lea.vmem %s1, 25
    %308 = vst.msk [vmem:[%s307] sm:$0x1] %vm306, %v305
    %s309 = scalar_lea.vmem %s1, 88
    %310 = vst.msk [vmem:[%s309] sm:$0x2] %vm306, %v305
    %s311 = scalar_lea.vmem %s1, 151
    %312 = vst.msk [vmem:[%s311] sm:$0x4] %vm306, %v305
    %s313 = scalar_lea.vmem %s1, 214
    %314 = vst.msk [vmem:[%s313] sm:$0x8] %vm306, %v305
    %v315 = vld [vmem:[#allocation0] sm:$0xf]
    %316 = vrot.lane.b32.xlu0 %v315, 102
    %v317 = vpop.permute.xlu0 %316
    %vm318 = vcmask 7168
    %s319 = scalar_lea.vmem %s1, 26
    %320 = vst.msk [vmem:[%s319] sm:$0x1] %vm318, %v317
    %s321 = scalar_lea.vmem %s1, 89
    %322 = vst.msk [vmem:[%s321] sm:$0x2] %vm318, %v317
    %s323 = scalar_lea.vmem %s1, 152
    %324 = vst.msk [vmem:[%s323] sm:$0x4] %vm318, %v317
    %s325 = scalar_lea.vmem %s1, 215
    %326 = vst.msk [vmem:[%s325] sm:$0x8] %vm318, %v317
    %v327 = vld [vmem:[#allocation0] sm:$0xf]
    %328 = vrot.lane.b32.xlu0 %v327, 101
    %v329 = vpop.permute.xlu0 %328
    %vm330 = vcmask 7168
    %s331 = scalar_lea.vmem %s1, 27
    %332 = vst.msk [vmem:[%s331] sm:$0x1] %vm330, %v329
    %s333 = scalar_lea.vmem %s1, 90
    %334 = vst.msk [vmem:[%s333] sm:$0x2] %vm330, %v329
    %s335 = scalar_lea.vmem %s1, 153
    %336 = vst.msk [vmem:[%s335] sm:$0x4] %vm330, %v329
    %s337 = scalar_lea.vmem %s1, 216
    %338 = vst.msk [vmem:[%s337] sm:$0x8] %vm330, %v329
    %v339 = vld [vmem:[#allocation0] sm:$0xf]
    %340 = vrot.lane.b32.xlu0 %v339, 100
    %v341 = vpop.permute.xlu0 %340
    %vm342 = vcmask 7168
    %s343 = scalar_lea.vmem %s1, 28
    %344 = vst.msk [vmem:[%s343] sm:$0x1] %vm342, %v341
    %s345 = scalar_lea.vmem %s1, 91
    %346 = vst.msk [vmem:[%s345] sm:$0x2] %vm342, %v341
    %s347 = scalar_lea.vmem %s1, 154
    %348 = vst.msk [vmem:[%s347] sm:$0x4] %vm342, %v341
    %s349 = scalar_lea.vmem %s1, 217
    %350 = vst.msk [vmem:[%s349] sm:$0x8] %vm342, %v341
    %v351 = vld [vmem:[#allocation0] sm:$0xf]
    %352 = vrot.lane.b32.xlu0 %v351, 99
    %v353 = vpop.permute.xlu0 %352
    %vm354 = vcmask 7168
    %s355 = scalar_lea.vmem %s1, 29
    %356 = vst.msk [vmem:[%s355] sm:$0x1] %vm354, %v353
    %s357 = scalar_lea.vmem %s1, 92
    %358 = vst.msk [vmem:[%s357] sm:$0x2] %vm354, %v353
    %s359 = scalar_lea.vmem %s1, 155
    %360 = vst.msk [vmem:[%s359] sm:$0x4] %vm354, %v353
    %s361 = scalar_lea.vmem %s1, 218
    %362 = vst.msk [vmem:[%s361] sm:$0x8] %vm354, %v353
    %v363 = vld [vmem:[#allocation0] sm:$0xf]
    %364 = vrot.lane.b32.xlu0 %v363, 98
    %v365 = vpop.permute.xlu0 %364
    %vm366 = vcmask 7168
    %s367 = scalar_lea.vmem %s1, 30
    %368 = vst.msk [vmem:[%s367] sm:$0x1] %vm366, %v365
    %s369 = scalar_lea.vmem %s1, 93
    %370 = vst.msk [vmem:[%s369] sm:$0x2] %vm366, %v365
    %s371 = scalar_lea.vmem %s1, 156
    %372 = vst.msk [vmem:[%s371] sm:$0x4] %vm366, %v365
    %s373 = scalar_lea.vmem %s1, 219
    %374 = vst.msk [vmem:[%s373] sm:$0x8] %vm366, %v365
    %v375 = vld [vmem:[#allocation0] sm:$0xf]
    %376 = vrot.lane.b32.xlu0 %v375, 97
    %v377 = vpop.permute.xlu0 %376
    %vm378 = vcmask 7168
    %s379 = scalar_lea.vmem %s1, 31
    %380 = vst.msk [vmem:[%s379] sm:$0x1] %vm378, %v377
    %s381 = scalar_lea.vmem %s1, 94
    %382 = vst.msk [vmem:[%s381] sm:$0x2] %vm378, %v377
    %s383 = scalar_lea.vmem %s1, 157
    %384 = vst.msk [vmem:[%s383] sm:$0x4] %vm378, %v377
    %s385 = scalar_lea.vmem %s1, 220
    %386 = vst.msk [vmem:[%s385] sm:$0x8] %vm378, %v377
    %v387 = vld [vmem:[#allocation0] sm:$0xf]
    %388 = vrot.lane.b32.xlu0 %v387, 96
    %v389 = vpop.permute.xlu0 %388
    %vm390 = vcmask 7168
    %s391 = scalar_lea.vmem %s1, 32
    %392 = vst.msk [vmem:[%s391] sm:$0x1] %vm390, %v389
    %s393 = scalar_lea.vmem %s1, 95
    %394 = vst.msk [vmem:[%s393] sm:$0x2] %vm390, %v389
    %s395 = scalar_lea.vmem %s1, 158
    %396 = vst.msk [vmem:[%s395] sm:$0x4] %vm390, %v389
    %s397 = scalar_lea.vmem %s1, 221
    %398 = vst.msk [vmem:[%s397] sm:$0x8] %vm390, %v389
    %v399 = vld [vmem:[#allocation0] sm:$0xf]
    %400 = vrot.lane.b32.xlu0 %v399, 95
    %v401 = vpop.permute.xlu0 %400
    %vm402 = vcmask 7168
    %s403 = scalar_lea.vmem %s1, 33
    %404 = vst.msk [vmem:[%s403] sm:$0x1] %vm402, %v401
    %s405 = scalar_lea.vmem %s1, 96
    %406 = vst.msk [vmem:[%s405] sm:$0x2] %vm402, %v401
    %s407 = scalar_lea.vmem %s1, 159
    %408 = vst.msk [vmem:[%s407] sm:$0x4] %vm402, %v401
    %s409 = scalar_lea.vmem %s1, 222
    %410 = vst.msk [vmem:[%s409] sm:$0x8] %vm402, %v401
    %v411 = vld [vmem:[#allocation0] sm:$0xf]
    %412 = vrot.lane.b32.xlu0 %v411, 94
    %v413 = vpop.permute.xlu0 %412
    %vm414 = vcmask 7168
    %s415 = scalar_lea.vmem %s1, 34
    %416 = vst.msk [vmem:[%s415] sm:$0x1] %vm414, %v413
    %s417 = scalar_lea.vmem %s1, 97
    %418 = vst.msk [vmem:[%s417] sm:$0x2] %vm414, %v413
    %s419 = scalar_lea.vmem %s1, 160
    %420 = vst.msk [vmem:[%s419] sm:$0x4] %vm414, %v413
    %s421 = scalar_lea.vmem %s1, 223
    %422 = vst.msk [vmem:[%s421] sm:$0x8] %vm414, %v413
    %v423 = vld [vmem:[#allocation0] sm:$0xf]
    %424 = vrot.lane.b32.xlu0 %v423, 93
    %v425 = vpop.permute.xlu0 %424
    %vm426 = vcmask 7168
    %s427 = scalar_lea.vmem %s1, 35
    %428 = vst.msk [vmem:[%s427] sm:$0x1] %vm426, %v425
    %s429 = scalar_lea.vmem %s1, 98
    %430 = vst.msk [vmem:[%s429] sm:$0x2] %vm426, %v425
    %s431 = scalar_lea.vmem %s1, 161
    %432 = vst.msk [vmem:[%s431] sm:$0x4] %vm426, %v425
    %s433 = scalar_lea.vmem %s1, 224
    %434 = vst.msk [vmem:[%s433] sm:$0x8] %vm426, %v425
    %v435 = vld [vmem:[#allocation0] sm:$0xf]
    %436 = vrot.lane.b32.xlu0 %v435, 92
    %v437 = vpop.permute.xlu0 %436
    %vm438 = vcmask 7168
    %s439 = scalar_lea.vmem %s1, 36
    %440 = vst.msk [vmem:[%s439] sm:$0x1] %vm438, %v437
    %s441 = scalar_lea.vmem %s1, 99
    %442 = vst.msk [vmem:[%s441] sm:$0x2] %vm438, %v437
    %s443 = scalar_lea.vmem %s1, 162
    %444 = vst.msk [vmem:[%s443] sm:$0x4] %vm438, %v437
    %s445 = scalar_lea.vmem %s1, 225
    %446 = vst.msk [vmem:[%s445] sm:$0x8] %vm438, %v437
    %v447 = vld [vmem:[#allocation0] sm:$0xf]
    %448 = vrot.lane.b32.xlu0 %v447, 91
    %v449 = vpop.permute.xlu0 %448
    %vm450 = vcmask 7168
    %s451 = scalar_lea.vmem %s1, 37
    %452 = vst.msk [vmem:[%s451] sm:$0x1] %vm450, %v449
    %s453 = scalar_lea.vmem %s1, 100
    %454 = vst.msk [vmem:[%s453] sm:$0x2] %vm450, %v449
    %s455 = scalar_lea.vmem %s1, 163
    %456 = vst.msk [vmem:[%s455] sm:$0x4] %vm450, %v449
    %s457 = scalar_lea.vmem %s1, 226
    %458 = vst.msk [vmem:[%s457] sm:$0x8] %vm450, %v449
    %v459 = vld [vmem:[#allocation0] sm:$0xf]
    %460 = vrot.lane.b32.xlu0 %v459, 90
    %v461 = vpop.permute.xlu0 %460
    %vm462 = vcmask 7168
    %s463 = scalar_lea.vmem %s1, 38
    %464 = vst.msk [vmem:[%s463] sm:$0x1] %vm462, %v461
    %s465 = scalar_lea.vmem %s1, 101
    %466 = vst.msk [vmem:[%s465] sm:$0x2] %vm462, %v461
    %s467 = scalar_lea.vmem %s1, 164
    %468 = vst.msk [vmem:[%s467] sm:$0x4] %vm462, %v461
    %s469 = scalar_lea.vmem %s1, 227
    %470 = vst.msk [vmem:[%s469] sm:$0x8] %vm462, %v461
    %v471 = vld [vmem:[#allocation0] sm:$0xf]
    %472 = vrot.lane.b32.xlu0 %v471, 89
    %v473 = vpop.permute.xlu0 %472
    %vm474 = vcmask 7168
    %s475 = scalar_lea.vmem %s1, 39
    %476 = vst.msk [vmem:[%s475] sm:$0x1] %vm474, %v473
    %s477 = scalar_lea.vmem %s1, 102
    %478 = vst.msk [vmem:[%s477] sm:$0x2] %vm474, %v473
    %s479 = scalar_lea.vmem %s1, 165
    %480 = vst.msk [vmem:[%s479] sm:$0x4] %vm474, %v473
    %s481 = scalar_lea.vmem %s1, 228
    %482 = vst.msk [vmem:[%s481] sm:$0x8] %vm474, %v473
    %v483 = vld [vmem:[#allocation0] sm:$0xf]
    %484 = vrot.lane.b32.xlu0 %v483, 88
    %v485 = vpop.permute.xlu0 %484
    %vm486 = vcmask 7168
    %s487 = scalar_lea.vmem %s1, 40
    %488 = vst.msk [vmem:[%s487] sm:$0x1] %vm486, %v485
    %s489 = scalar_lea.vmem %s1, 103
    %490 = vst.msk [vmem:[%s489] sm:$0x2] %vm486, %v485
    %s491 = scalar_lea.vmem %s1, 166
    %492 = vst.msk [vmem:[%s491] sm:$0x4] %vm486, %v485
    %s493 = scalar_lea.vmem %s1, 229
    %494 = vst.msk [vmem:[%s493] sm:$0x8] %vm486, %v485
    %v495 = vld [vmem:[#allocation0] sm:$0xf]
    %496 = vrot.lane.b32.xlu0 %v495, 87
    %v497 = vpop.permute.xlu0 %496
    %vm498 = vcmask 7168
    %s499 = scalar_lea.vmem %s1, 41
    %500 = vst.msk [vmem:[%s499] sm:$0x1] %vm498, %v497
    %s501 = scalar_lea.vmem %s1, 104
    %502 = vst.msk [vmem:[%s501] sm:$0x2] %vm498, %v497
    %s503 = scalar_lea.vmem %s1, 167
    %504 = vst.msk [vmem:[%s503] sm:$0x4] %vm498, %v497
    %s505 = scalar_lea.vmem %s1, 230
    %506 = vst.msk [vmem:[%s505] sm:$0x8] %vm498, %v497
    %v507 = vld [vmem:[#allocation0] sm:$0xf]
    %508 = vrot.lane.b32.xlu0 %v507, 86
    %v509 = vpop.permute.xlu0 %508
    %vm510 = vcmask 7168
    %s511 = scalar_lea.vmem %s1, 42
    %512 = vst.msk [vmem:[%s511] sm:$0x1] %vm510, %v509
    %s513 = scalar_lea.vmem %s1, 105
    %514 = vst.msk [vmem:[%s513] sm:$0x2] %vm510, %v509
    %s515 = scalar_lea.vmem %s1, 168
    %516 = vst.msk [vmem:[%s515] sm:$0x4] %vm510, %v509
    %s517 = scalar_lea.vmem %s1, 231
    %518 = vst.msk [vmem:[%s517] sm:$0x8] %vm510, %v509
    %v519 = vld [vmem:[#allocation0] sm:$0xf]
    %520 = vrot.lane.b32.xlu0 %v519, 85
    %v521 = vpop.permute.xlu0 %520
    %vm522 = vcmask 7168
    %s523 = scalar_lea.vmem %s1, 43
    %524 = vst.msk [vmem:[%s523] sm:$0x1] %vm522, %v521
    %s525 = scalar_lea.vmem %s1, 106
    %526 = vst.msk [vmem:[%s525] sm:$0x2] %vm522, %v521
    %s527 = scalar_lea.vmem %s1, 169
    %528 = vst.msk [vmem:[%s527] sm:$0x4] %vm522, %v521
    %s529 = scalar_lea.vmem %s1, 232
    %530 = vst.msk [vmem:[%s529] sm:$0x8] %vm522, %v521
    %v531 = vld [vmem:[#allocation0] sm:$0xf]
    %532 = vrot.lane.b32.xlu0 %v531, 84
    %v533 = vpop.permute.xlu0 %532
    %vm534 = vcmask 7168
    %s535 = scalar_lea.vmem %s1, 44
    %536 = vst.msk [vmem:[%s535] sm:$0x1] %vm534, %v533
    %s537 = scalar_lea.vmem %s1, 107
    %538 = vst.msk [vmem:[%s537] sm:$0x2] %vm534, %v533
    %s539 = scalar_lea.vmem %s1, 170
    %540 = vst.msk [vmem:[%s539] sm:$0x4] %vm534, %v533
    %s541 = scalar_lea.vmem %s1, 233
    %542 = vst.msk [vmem:[%s541] sm:$0x8] %vm534, %v533
    %v543 = vld [vmem:[#allocation0] sm:$0xf]
    %544 = vrot.lane.b32.xlu0 %v543, 83
    %v545 = vpop.permute.xlu0 %544
    %vm546 = vcmask 7168
    %s547 = scalar_lea.vmem %s1, 45
    %548 = vst.msk [vmem:[%s547] sm:$0x1] %vm546, %v545
    %s549 = scalar_lea.vmem %s1, 108
    %550 = vst.msk [vmem:[%s549] sm:$0x2] %vm546, %v545
    %s551 = scalar_lea.vmem %s1, 171
    %552 = vst.msk [vmem:[%s551] sm:$0x4] %vm546, %v545
    %s553 = scalar_lea.vmem %s1, 234
    %554 = vst.msk [vmem:[%s553] sm:$0x8] %vm546, %v545
    %v555 = vld [vmem:[#allocation0] sm:$0xf]
    %556 = vrot.lane.b32.xlu0 %v555, 82
    %v557 = vpop.permute.xlu0 %556
    %vm558 = vcmask 7168
    %s559 = scalar_lea.vmem %s1, 46
    %560 = vst.msk [vmem:[%s559] sm:$0x1] %vm558, %v557
    %s561 = scalar_lea.vmem %s1, 109
    %562 = vst.msk [vmem:[%s561] sm:$0x2] %vm558, %v557
    %s563 = scalar_lea.vmem %s1, 172
    %564 = vst.msk [vmem:[%s563] sm:$0x4] %vm558, %v557
    %s565 = scalar_lea.vmem %s1, 235
    %566 = vst.msk [vmem:[%s565] sm:$0x8] %vm558, %v557
    %v567 = vld [vmem:[#allocation0] sm:$0xf]
    %568 = vrot.lane.b32.xlu0 %v567, 81
    %v569 = vpop.permute.xlu0 %568
    %vm570 = vcmask 7168
    %s571 = scalar_lea.vmem %s1, 47
    %572 = vst.msk [vmem:[%s571] sm:$0x1] %vm570, %v569
    %s573 = scalar_lea.vmem %s1, 110
    %574 = vst.msk [vmem:[%s573] sm:$0x2] %vm570, %v569
    %s575 = scalar_lea.vmem %s1, 173
    %576 = vst.msk [vmem:[%s575] sm:$0x4] %vm570, %v569
    %s577 = scalar_lea.vmem %s1, 236
    %578 = vst.msk [vmem:[%s577] sm:$0x8] %vm570, %v569
    %v579 = vld [vmem:[#allocation0] sm:$0xf]
    %580 = vrot.lane.b32.xlu0 %v579, 80
    %v581 = vpop.permute.xlu0 %580
    %vm582 = vcmask 7168
    %s583 = scalar_lea.vmem %s1, 48
    %584 = vst.msk [vmem:[%s583] sm:$0x1] %vm582, %v581
    %s585 = scalar_lea.vmem %s1, 111
    %586 = vst.msk [vmem:[%s585] sm:$0x2] %vm582, %v581
    %s587 = scalar_lea.vmem %s1, 174
    %588 = vst.msk [vmem:[%s587] sm:$0x4] %vm582, %v581
    %s589 = scalar_lea.vmem %s1, 237
    %590 = vst.msk [vmem:[%s589] sm:$0x8] %vm582, %v581
    %v591 = vld [vmem:[#allocation0] sm:$0xf]
    %592 = vrot.lane.b32.xlu0 %v591, 79
    %v593 = vpop.permute.xlu0 %592
    %vm594 = vcmask 7168
    %s595 = scalar_lea.vmem %s1, 49
    %596 = vst.msk [vmem:[%s595] sm:$0x1] %vm594, %v593
    %s597 = scalar_lea.vmem %s1, 112
    %598 = vst.msk [vmem:[%s597] sm:$0x2] %vm594, %v593
    %s599 = scalar_lea.vmem %s1, 175
    %600 = vst.msk [vmem:[%s599] sm:$0x4] %vm594, %v593
    %s601 = scalar_lea.vmem %s1, 238
    %602 = vst.msk [vmem:[%s601] sm:$0x8] %vm594, %v593
    %v603 = vld [vmem:[#allocation0] sm:$0xf]
    %604 = vrot.lane.b32.xlu0 %v603, 78
    %v605 = vpop.permute.xlu0 %604
    %vm606 = vcmask 7168
    %s607 = scalar_lea.vmem %s1, 50
    %608 = vst.msk [vmem:[%s607] sm:$0x1] %vm606, %v605
    %s609 = scalar_lea.vmem %s1, 113
    %610 = vst.msk [vmem:[%s609] sm:$0x2] %vm606, %v605
    %s611 = scalar_lea.vmem %s1, 176
    %612 = vst.msk [vmem:[%s611] sm:$0x4] %vm606, %v605
    %s613 = scalar_lea.vmem %s1, 239
    %614 = vst.msk [vmem:[%s613] sm:$0x8] %vm606, %v605
    %v615 = vld [vmem:[#allocation0] sm:$0xf]
    %616 = vrot.lane.b32.xlu0 %v615, 77
    %v617 = vpop.permute.xlu0 %616
    %vm618 = vcmask 7168
    %s619 = scalar_lea.vmem %s1, 51
    %620 = vst.msk [vmem:[%s619] sm:$0x1] %vm618, %v617
    %s621 = scalar_lea.vmem %s1, 114
    %622 = vst.msk [vmem:[%s621] sm:$0x2] %vm618, %v617
    %s623 = scalar_lea.vmem %s1, 177
    %624 = vst.msk [vmem:[%s623] sm:$0x4] %vm618, %v617
    %s625 = scalar_lea.vmem %s1, 240
    %626 = vst.msk [vmem:[%s625] sm:$0x8] %vm618, %v617
    %v627 = vld [vmem:[#allocation0] sm:$0xf]
    %628 = vrot.lane.b32.xlu0 %v627, 76
    %v629 = vpop.permute.xlu0 %628
    %vm630 = vcmask 7168
    %s631 = scalar_lea.vmem %s1, 52
    %632 = vst.msk [vmem:[%s631] sm:$0x1] %vm630, %v629
    %s633 = scalar_lea.vmem %s1, 115
    %634 = vst.msk [vmem:[%s633] sm:$0x2] %vm630, %v629
    %s635 = scalar_lea.vmem %s1, 178
    %636 = vst.msk [vmem:[%s635] sm:$0x4] %vm630, %v629
    %s637 = scalar_lea.vmem %s1, 241
    %638 = vst.msk [vmem:[%s637] sm:$0x8] %vm630, %v629
    %v639 = vld [vmem:[#allocation0] sm:$0xf]
    %640 = vrot.lane.b32.xlu0 %v639, 75
    %v641 = vpop.permute.xlu0 %640
    %vm642 = vcmask 7168
    %s643 = scalar_lea.vmem %s1, 53
    %644 = vst.msk [vmem:[%s643] sm:$0x1] %vm642, %v641
    %s645 = scalar_lea.vmem %s1, 116
    %646 = vst.msk [vmem:[%s645] sm:$0x2] %vm642, %v641
    %s647 = scalar_lea.vmem %s1, 179
    %648 = vst.msk [vmem:[%s647] sm:$0x4] %vm642, %v641
    %s649 = scalar_lea.vmem %s1, 242
    %650 = vst.msk [vmem:[%s649] sm:$0x8] %vm642, %v641
    %v651 = vld [vmem:[#allocation0] sm:$0xf]
    %652 = vrot.lane.b32.xlu0 %v651, 74
    %v653 = vpop.permute.xlu0 %652
    %vm654 = vcmask 7168
    %s655 = scalar_lea.vmem %s1, 54
    %656 = vst.msk [vmem:[%s655] sm:$0x1] %vm654, %v653
    %s657 = scalar_lea.vmem %s1, 117
    %658 = vst.msk [vmem:[%s657] sm:$0x2] %vm654, %v653
    %s659 = scalar_lea.vmem %s1, 180
    %660 = vst.msk [vmem:[%s659] sm:$0x4] %vm654, %v653
    %s661 = scalar_lea.vmem %s1, 243
    %662 = vst.msk [vmem:[%s661] sm:$0x8] %vm654, %v653
    %v663 = vld [vmem:[#allocation0] sm:$0xf]
    %664 = vrot.lane.b32.xlu0 %v663, 73
    %v665 = vpop.permute.xlu0 %664
    %vm666 = vcmask 7168
    %s667 = scalar_lea.vmem %s1, 55
    %668 = vst.msk [vmem:[%s667] sm:$0x1] %vm666, %v665
    %s669 = scalar_lea.vmem %s1, 118
    %670 = vst.msk [vmem:[%s669] sm:$0x2] %vm666, %v665
    %s671 = scalar_lea.vmem %s1, 181
    %672 = vst.msk [vmem:[%s671] sm:$0x4] %vm666, %v665
    %s673 = scalar_lea.vmem %s1, 244
    %674 = vst.msk [vmem:[%s673] sm:$0x8] %vm666, %v665
    %v675 = vld [vmem:[#allocation0] sm:$0xf]
    %676 = vrot.lane.b32.xlu0 %v675, 72
    %v677 = vpop.permute.xlu0 %676
    %vm678 = vcmask 7168
    %s679 = scalar_lea.vmem %s1, 56
    %680 = vst.msk [vmem:[%s679] sm:$0x1] %vm678, %v677
    %s681 = scalar_lea.vmem %s1, 119
    %682 = vst.msk [vmem:[%s681] sm:$0x2] %vm678, %v677
    %s683 = scalar_lea.vmem %s1, 182
    %684 = vst.msk [vmem:[%s683] sm:$0x4] %vm678, %v677
    %s685 = scalar_lea.vmem %s1, 245
    %686 = vst.msk [vmem:[%s685] sm:$0x8] %vm678, %v677
    %v687 = vld [vmem:[#allocation0] sm:$0xf]
    %688 = vrot.lane.b32.xlu0 %v687, 71
    %v689 = vpop.permute.xlu0 %688
    %vm690 = vcmask 7168
    %s691 = scalar_lea.vmem %s1, 57
    %692 = vst.msk [vmem:[%s691] sm:$0x1] %vm690, %v689
    %s693 = scalar_lea.vmem %s1, 120
    %694 = vst.msk [vmem:[%s693] sm:$0x2] %vm690, %v689
    %s695 = scalar_lea.vmem %s1, 183
    %696 = vst.msk [vmem:[%s695] sm:$0x4] %vm690, %v689
    %s697 = scalar_lea.vmem %s1, 246
    %698 = vst.msk [vmem:[%s697] sm:$0x8] %vm690, %v689
    %v699 = vld [vmem:[#allocation0] sm:$0xf]
    %700 = vrot.lane.b32.xlu0 %v699, 70
    %v701 = vpop.permute.xlu0 %700
    %vm702 = vcmask 7168
    %s703 = scalar_lea.vmem %s1, 58
    %704 = vst.msk [vmem:[%s703] sm:$0x1] %vm702, %v701
    %s705 = scalar_lea.vmem %s1, 121
    %706 = vst.msk [vmem:[%s705] sm:$0x2] %vm702, %v701
    %s707 = scalar_lea.vmem %s1, 184
    %708 = vst.msk [vmem:[%s707] sm:$0x4] %vm702, %v701
    %s709 = scalar_lea.vmem %s1, 247
    %710 = vst.msk [vmem:[%s709] sm:$0x8] %vm702, %v701
    %v711 = vld [vmem:[#allocation0] sm:$0xf]
    %712 = vrot.lane.b32.xlu0 %v711, 69
    %v713 = vpop.permute.xlu0 %712
    %vm714 = vcmask 7168
    %s715 = scalar_lea.vmem %s1, 59
    %716 = vst.msk [vmem:[%s715] sm:$0x1] %vm714, %v713
    %s717 = scalar_lea.vmem %s1, 122
    %718 = vst.msk [vmem:[%s717] sm:$0x2] %vm714, %v713
    %s719 = scalar_lea.vmem %s1, 185
    %720 = vst.msk [vmem:[%s719] sm:$0x4] %vm714, %v713
    %s721 = scalar_lea.vmem %s1, 248
    %722 = vst.msk [vmem:[%s721] sm:$0x8] %vm714, %v713
    %v723 = vld [vmem:[#allocation0] sm:$0xf]
    %724 = vrot.lane.b32.xlu0 %v723, 68
    %v725 = vpop.permute.xlu0 %724
    %vm726 = vcmask 7168
    %s727 = scalar_lea.vmem %s1, 60
    %728 = vst.msk [vmem:[%s727] sm:$0x1] %vm726, %v725
    %s729 = scalar_lea.vmem %s1, 123
    %730 = vst.msk [vmem:[%s729] sm:$0x2] %vm726, %v725
    %s731 = scalar_lea.vmem %s1, 186
    %732 = vst.msk [vmem:[%s731] sm:$0x4] %vm726, %v725
    %s733 = scalar_lea.vmem %s1, 249
    %734 = vst.msk [vmem:[%s733] sm:$0x8] %vm726, %v725
    %v735 = vld [vmem:[#allocation0] sm:$0xf]
    %736 = vrot.lane.b32.xlu0 %v735, 67
    %v737 = vpop.permute.xlu0 %736
    %vm738 = vcmask 7168
    %s739 = scalar_lea.vmem %s1, 61
    %740 = vst.msk [vmem:[%s739] sm:$0x1] %vm738, %v737
    %s741 = scalar_lea.vmem %s1, 124
    %742 = vst.msk [vmem:[%s741] sm:$0x2] %vm738, %v737
    %s743 = scalar_lea.vmem %s1, 187
    %744 = vst.msk [vmem:[%s743] sm:$0x4] %vm738, %v737
    %s745 = scalar_lea.vmem %s1, 250
    %746 = vst.msk [vmem:[%s745] sm:$0x8] %vm738, %v737
    %v747 = vld [vmem:[#allocation0] sm:$0xf]
    %748 = vrot.lane.b32.xlu0 %v747, 66
    %v749 = vpop.permute.xlu0 %748
    %vm750 = vcmask 7168
    %s751 = scalar_lea.vmem %s1, 62
    %752 = vst.msk [vmem:[%s751] sm:$0x1] %vm750, %v749
    %s753 = scalar_lea.vmem %s1, 125
    %754 = vst.msk [vmem:[%s753] sm:$0x2] %vm750, %v749
    %s755 = scalar_lea.vmem %s1, 188
    %756 = vst.msk [vmem:[%s755] sm:$0x4] %vm750, %v749
    %s757 = scalar_lea.vmem %s1, 251
    %758 = vst.msk [vmem:[%s757] sm:$0x8] %vm750, %v749
    %v759 = vld [vmem:[#allocation0] sm:$0xf]
    %760 = vrot.lane.b32.xlu0 %v759, 65
    %v761 = vpop.permute.xlu0 %760
    %vm762 = vcmask 7168
    %s763 = scalar_lea.vmem %s1, 63
    %764 = vst.msk [vmem:[%s763] sm:$0x1] %vm762, %v761
    %s765 = scalar_lea.vmem %s1, 126
    %766 = vst.msk [vmem:[%s765] sm:$0x2] %vm762, %v761
    %s767 = scalar_lea.vmem %s1, 189
    %768 = vst.msk [vmem:[%s767] sm:$0x4] %vm762, %v761
    %s769 = scalar_lea.vmem %s1, 252
    %770 = vst.msk [vmem:[%s769] sm:$0x8] %vm762, %v761

// kernel: tile.2
$region0: #{tile.2}
  %s0 = inlined_call_operand.vmem [shape: f32[4,8], index: 0, kind: input, shape index: {}]
  %s1 = inlined_call_operand.vmem [shape: f32[32,1], index: 1, kind: output, shape index: {}]
  $region1: #{tile.2} parent=0
    #allocation0 [shape = 'u8[4096]{0}', space=vmem, size = 0x1000, scoped, tag = 'scoped mem for input reshape']
    %s3 = sshllo.u32 0, 4
    %v4 = vld [vmem:[%s0] sm:%s3]
    %5 = vst [vmem:[#allocation0] sm:%s3] %v4
    %v6 = vld [vmem:[#allocation0] sm:$0xf]
    %vm7 = vcmask 7168
    %8 = vst.msk [vmem:[%s1] ss:$8 sm:$0xf] %vm7, %v6
    %v9 = vld [vmem:[#allocation0] sm:$0xf]
    %10 = vrot.lane.b32.xlu0 %v9, 127
    %v11 = vpop.permute.xlu0 %10
    %vm12 = vcmask 7168
    %s13 = scalar_lea.vmem %s1, 1
    %14 = vst.msk [vmem:[%s13] ss:$8 sm:$0xf] %vm12, %v11
    %v15 = vld [vmem:[#allocation0] sm:$0xf]
    %16 = vrot.lane.b32.xlu0 %v15, 126
    %v17 = vpop.permute.xlu0 %16
    %vm18 = vcmask 7168
    %s19 = scalar_lea.vmem %s1, 2
    %20 = vst.msk [vmem:[%s19] ss:$8 sm:$0xf] %vm18, %v17
    %v21 = vld [vmem:[#allocation0] sm:$0xf]
    %22 = vrot.lane.b32.xlu0 %v21, 125
    %v23 = vpop.permute.xlu0 %22
    %vm24 = vcmask 7168
    %s25 = scalar_lea.vmem %s1, 3
    %26 = vst.msk [vmem:[%s25] ss:$8 sm:$0xf] %vm24, %v23
    %v27 = vld [vmem:[#allocation0] sm:$0xf]
    %28 = vrot.lane.b32.xlu0 %v27, 124
    %v29 = vpop.permute.xlu0 %28
    %vm30 = vcmask 7168
    %s31 = scalar_lea.vmem %s1, 4
    %32 = vst.msk [vmem:[%s31] ss:$8 sm:$0xf] %vm30, %v29
    %v33 = vld [vmem:[#allocation0] sm:$0xf]
    %34 = vrot.lane.b32.xlu0 %v33, 123
    %v35 = vpop.permute.xlu0 %34
    %vm36 = vcmask 7168
    %s37 = scalar_lea.vmem %s1, 5
    %38 = vst.msk [vmem:[%s37] ss:$8 sm:$0xf] %vm36, %v35
    %v39 = vld [vmem:[#allocation0] sm:$0xf]
    %40 = vrot.lane.b32.xlu0 %v39, 122
    %v41 = vpop.permute.xlu0 %40
    %vm42 = vcmask 7168
    %s43 = scalar_lea.vmem %s1, 6
    %44 = vst.msk [vmem:[%s43] ss:$8 sm:$0xf] %vm42, %v41
    %v45 = vld [vmem:[#allocation0] sm:$0xf]
    %46 = vrot.lane.b32.xlu0 %v45, 121
    %v47 = vpop.permute.xlu0 %46
    %vm48 = vcmask 7168
    %s49 = scalar_lea.vmem %s1, 7
    %50 = vst.msk [vmem:[%s49] ss:$8 sm:$0xf] %vm48, %v47

// kernel: spatial_map_forward.1
$region0: #{spatial_map_forward.1}
  #allocation0 [shape = 'u32[]', space=smem, size = 0x4, offset = 0x4, fixed_abs, tag = 'smem constant byte address 0x4 - core index']
  #allocation1 [shape = 'u32[144,128]{1,0:T(1,128)}', space=vmem, size = 0x12000, scoped, tag = 'internal scratch']
  %s0 = inlined_call_operand.vmem [shape: f32[2,16,16], index: 0, kind: input, shape index: {}]
  %s1 = inlined_call_operand.vmem [shape: f32[2,16,16], index: 1, kind: input, shape index: {}]
  %s2 = inlined_call_operand.vmem [shape: f32[256,16], index: 2, kind: input, shape index: {}]
  %s3 = inlined_call_operand.vmem [shape: f32[256,16], index: 3, kind: input, shape index: {}]
  %s4 = inlined_call_operand.vmem [shape: f32[256,1], index: 4, kind: input, shape index: {}]
  %s5 = inlined_call_operand.vmem [shape: f32[256,256], index: 5, kind: input, shape index: {}]
  %s6 = inlined_call_operand.vmem [shape: f32[256,1], index: 6, kind: input, shape index: {}]
  %s7 = inlined_call_operand.vmem [shape: f32[32,256], index: 7, kind: input, shape index: {}]
  %s8 = inlined_call_operand.vmem [shape: f32[32,1], index: 8, kind: input, shape index: {}]
  %s9 = inlined_call_operand.hbm [shape: f32[2,32,16], index: 9, kind: output, shape index: {}]
  %s10 = sld [smem:[#allocation0]]
  $region69: #{spatial_map_forward.1} parent=0
    _
  %s12 = ssub.s32 1, %s10
  %s13 = scalar_select 0, %s12, %s10
  $region1: #{spatial_map_forward.1} parent=0
    #allocation2 [shape = 'u8[32768]{0}', space=vmem, size = 0x8000, scoped, tag = 'output window, operand 0']
    #allocation3 [shape = 's32[2]{0}', space=sflag, size = 0x8, scoped, tag = 'scoped memory for spatial_map_forward.1']
    %14 = vsyncpa [#allocation3], 0
    %s15 = scalar_lea.sflag [#allocation3], 1
    %16 = vsyncpa %s15, 0
    loop: start=0, step=1, limit=4
    $region2: #{spatial_map_forward.1} parent=1 // loop_pre_header
      _
    $region3: #{spatial_map_forward.1} parent=1 // loop_header
      %s18 = sphi 0, %s22
      %p19 = scmp.ge.s32.totalorder %s18, 4
      %s25 = sphi 0, %s37
      %s26 = sphi 0, %s33
      %s27 = sphi 0, %s25
      %s28 = sphi 0, %s26
      %s29 = sphi 0, %s27
      %s30 = sphi 0, %s28
      %s42 = sphi 0, %s44
      %s45 = sphi 0, %s42
      %s46 = sphi 0, %s45
      %s62 = sphi 0, %s46
      %s70 = sphi 0, %s72
      %s73 = sphi 0, %s70
      %s74 = sphi 0, %s73
      %s90 = sphi 0, %s74
      %s94 = sphi 0, %s94
      %s96 = sphi 0, %s94
      %s97 = sphi 0, %s96
      %s111 = sphi 0, %s97
      %s115 = sphi 0, %s115
      %s117 = sphi 0, %s115
      %s118 = sphi 0, %s117
      %s132 = sphi 0, %s118
      %s136 = sphi 0, %s136
      %s138 = sphi 0, %s136
      %s139 = sphi 0, %s138
      %s153 = sphi 0, %s139
      %s157 = sphi 0, %s157
      %s159 = sphi 0, %s157
      %s160 = sphi 0, %s159
      %s174 = sphi 0, %s160
      %s178 = sphi 0, %s178
      %s180 = sphi 0, %s178
      %s181 = sphi 0, %s180
      %s195 = sphi 0, %s181
      %s199 = sphi 0, %s199
      %s201 = sphi 0, %s199
      %s202 = sphi 0, %s201
      %s216 = sphi 0, %s202
      %s220 = sphi 0, %s220
      %s222 = sphi 0, %s220
      %s223 = sphi 0, %s222
      %s237 = sphi 0, %s223
      %s245 = sphi 0, %s247
      %s248 = sphi 0, %s245
      %s249 = sphi 0, %s248
      %s265 = sphi 0, %s249
    $region4: #{spatial_map_forward.1} parent=1 // loop_header_branch
      %21 = sbr.rel (%p19) target = $region8
    $region5: #{spatial_map_forward.1} parent=1 // loop_body
      %s23 = ssub.s32 %s18, 1
      %s24 = ssub.s32 %s18, 2
      %s31 = sadd.s32 1, %s26
      %p32 = scmp.ge.s32.totalorder %s31, 1
      %s33 = scalar_select %p32, 0, %s31
      %s34 = sadd.s32 1, %s25
      %s35 = scalar_select %p32, %s34, %s25
      %p36 = scmp.ge.s32.totalorder %s35, 2
      %s37 = scalar_select %p36, 0, %s35
      %s38 = ssub.s32 %s25, %s37
      %s39 = ssub.s32 %s26, %s33
      %s40 = sor.u32 %s38, %s39
      %p41 = scmp.eq.s32.totalorder %s40, 0
      %s43 = sadd.s32 %s42, 1
      %s44 = scalar_select %p41, %s42, %s43
      %p47 = pneg %p41
      %p48 = scmp.eq.s32.totalorder %s18, 1
      %p49 = por %p47, %p48
      %p50 = scmp.ne.s32.totalorder %s42, %s45
      %p51 = scmp.eq.s32.totalorder %s18, 0
      %p52 = por %p50, %p51
      %p53 = scmp.ne.s32.totalorder %s42, %s45
      %p54 = scmp.eq.s32.totalorder %s23, 1
      %p55 = por %p53, %p54
      %p56 = scmp.ne.s32.totalorder %s45, %s46
      %p57 = scmp.eq.s32.totalorder %s23, 0
      %p58 = por %p56, %p57
      %p59 = scmp.ne.s32.totalorder %s45, %s46
      %p60 = scmp.eq.s32.totalorder %s24, 1
      %p61 = por %p59, %p60
      %p63 = scmp.ne.s32.totalorder %s46, %s62
      %p64 = scmp.eq.s32.totalorder %s24, 0
      %p65 = por %p63, %p64
      %s66 = ssub.s32 %s25, %s37
      %s67 = ssub.s32 %s26, %s33
      %s68 = sor.u32 %s66, %s67
      %p69 = scmp.eq.s32.totalorder %s68, 0
      %s71 = sadd.s32 %s70, 1
      %s72 = scalar_select %p69, %s70, %s71
      %p75 = pneg %p69
      %p76 = scmp.eq.s32.totalorder %s18, 1
      %p77 = por %p75, %p76
      %p78 = scmp.ne.s32.totalorder %s70, %s73
      %p79 = scmp.eq.s32.totalorder %s18, 0
      %p80 = por %p78, %p79
      %p81 = scmp.ne.s32.totalorder %s70, %s73
      %p82 = scmp.eq.s32.totalorder %s23, 1
      %p83 = por %p81, %p82
      %p84 = scmp.ne.s32.totalorder %s73, %s74
      %p85 = scmp.eq.s32.totalorder %s23, 0
      %p86 = por %p84, %p85
      %p87 = scmp.ne.s32.totalorder %s73, %s74
      %p88 = scmp.eq.s32.totalorder %s24, 1
      %p89 = por %p87, %p88
      %p91 = scmp.ne.s32.totalorder %s74, %s90
      %p92 = scmp.eq.s32.totalorder %s24, 0
      %p93 = por %p91, %p92
      %s95 = sadd.s32 %s94, 1
      %p98 = scmp.eq.s32.totalorder %s18, 1
      %p99 = scmp.ne.s32.totalorder %s94, %s96
      %p100 = scmp.eq.s32.totalorder %s18, 0
      %p101 = por %p99, %p100
      %p102 = scmp.ne.s32.totalorder %s94, %s96
      %p103 = scmp.eq.s32.totalorder %s23, 1
      %p104 = por %p102, %p103
      %p105 = scmp.ne.s32.totalorder %s96, %s97
      %p106 = scmp.eq.s32.totalorder %s23, 0
      %p107 = por %p105, %p106
      %p108 = scmp.ne.s32.totalorder %s96, %s97
      %p109 = scmp.eq.s32.totalorder %s24, 1
      %p110 = por %p108, %p109
      %p112 = scmp.ne.s32.totalorder %s97, %s111
      %p113 = scmp.eq.s32.totalorder %s24, 0
      %p114 = por %p112, %p113
      %s116 = sadd.s32 %s115, 1
      %p119 = scmp.eq.s32.totalorder %s18, 1
      %p120 = scmp.ne.s32.totalorder %s115, %s117
      %p121 = scmp.eq.s32.totalorder %s18, 0
      %p122 = por %p120, %p121
      %p123 = scmp.ne.s32.totalorder %s115, %s117
      %p124 = scmp.eq.s32.totalorder %s23, 1
      %p125 = por %p123, %p124
      %p126 = scmp.ne.s32.totalorder %s117, %s118
      %p127 = scmp.eq.s32.totalorder %s23, 0
      %p128 = por %p126, %p127
      %p129 = scmp.ne.s32.totalorder %s117, %s118
      %p130 = scmp.eq.s32.totalorder %s24, 1
      %p131 = por %p129, %p130
      %p133 = scmp.ne.s32.totalorder %s118, %s132
      %p134 = scmp.eq.s32.totalorder %s24, 0
      %p135 = por %p133, %p134
      %s137 = sadd.s32 %s136, 1
      %p140 = scmp.eq.s32.totalorder %s18, 1
      %p141 = scmp.ne.s32.totalorder %s136, %s138
      %p142 = scmp.eq.s32.totalorder %s18, 0
      %p143 = por %p141, %p142
      %p144 = scmp.ne.s32.totalorder %s136, %s138
      %p145 = scmp.eq.s32.totalorder %s23, 1
      %p146 = por %p144, %p145
      %p147 = scmp.ne.s32.totalorder %s138, %s139
      %p148 = scmp.eq.s32.totalorder %s23, 0
      %p149 = por %p147, %p148
      %p150 = scmp.ne.s32.totalorder %s138, %s139
      %p151 = scmp.eq.s32.totalorder %s24, 1
      %p152 = por %p150, %p151
      %p154 = scmp.ne.s32.totalorder %s139, %s153
      %p155 = scmp.eq.s32.totalorder %s24, 0
      %p156 = por %p154, %p155
      %s158 = sadd.s32 %s157, 1
      %p161 = scmp.eq.s32.totalorder %s18, 1
      %p162 = scmp.ne.s32.totalorder %s157, %s159
      %p163 = scmp.eq.s32.totalorder %s18, 0
      %p164 = por %p162, %p163
      %p165 = scmp.ne.s32.totalorder %s157, %s159
      %p166 = scmp.eq.s32.totalorder %s23, 1
      %p167 = por %p165, %p166
      %p168 = scmp.ne.s32.totalorder %s159, %s160
      %p169 = scmp.eq.s32.totalorder %s23, 0
      %p170 = por %p168, %p169
      %p171 = scmp.ne.s32.totalorder %s159, %s160
      %p172 = scmp.eq.s32.totalorder %s24, 1
      %p173 = por %p171, %p172
      %p175 = scmp.ne.s32.totalorder %s160, %s174
      %p176 = scmp.eq.s32.totalorder %s24, 0
      %p177 = por %p175, %p176
      %s179 = sadd.s32 %s178, 1
      %p182 = scmp.eq.s32.totalorder %s18, 1
      %p183 = scmp.ne.s32.totalorder %s178, %s180
      %p184 = scmp.eq.s32.totalorder %s18, 0
      %p185 = por %p183, %p184
      %p186 = scmp.ne.s32.totalorder %s178, %s180
      %p187 = scmp.eq.s32.totalorder %s23, 1
      %p188 = por %p186, %p187
      %p189 = scmp.ne.s32.totalorder %s180, %s181
      %p190 = scmp.eq.s32.totalorder %s23, 0
      %p191 = por %p189, %p190
      %p192 = scmp.ne.s32.totalorder %s180, %s181
      %p193 = scmp.eq.s32.totalorder %s24, 1
      %p194 = por %p192, %p193
      %p196 = scmp.ne.s32.totalorder %s181, %s195
      %p197 = scmp.eq.s32.totalorder %s24, 0
      %p198 = por %p196, %p197
      %s200 = sadd.s32 %s199, 1
      %p203 = scmp.eq.s32.totalorder %s18, 1
      %p204 = scmp.ne.s32.totalorder %s199, %s201
      %p205 = scmp.eq.s32.totalorder %s18, 0
      %p206 = por %p204, %p205
      %p207 = scmp.ne.s32.totalorder %s199, %s201
      %p208 = scmp.eq.s32.totalorder %s23, 1
      %p209 = por %p207, %p208
      %p210 = scmp.ne.s32.totalorder %s201, %s202
      %p211 = scmp.eq.s32.totalorder %s23, 0
      %p212 = por %p210, %p211
      %p213 = scmp.ne.s32.totalorder %s201, %s202
      %p214 = scmp.eq.s32.totalorder %s24, 1
      %p215 = por %p213, %p214
      %p217 = scmp.ne.s32.totalorder %s202, %s216
      %p218 = scmp.eq.s32.totalorder %s24, 0
      %p219 = por %p217, %p218
      %s221 = sadd.s32 %s220, 1
      %p224 = scmp.eq.s32.totalorder %s18, 1
      %p225 = scmp.ne.s32.totalorder %s220, %s222
      %p226 = scmp.eq.s32.totalorder %s18, 0
      %p227 = por %p225, %p226
      %p228 = scmp.ne.s32.totalorder %s220, %s222
      %p229 = scmp.eq.s32.totalorder %s23, 1
      %p230 = por %p228, %p229
      %p231 = scmp.ne.s32.totalorder %s222, %s223
      %p232 = scmp.eq.s32.totalorder %s23, 0
      %p233 = por %p231, %p232
      %p234 = scmp.ne.s32.totalorder %s222, %s223
      %p235 = scmp.eq.s32.totalorder %s24, 1
      %p236 = por %p234, %p235
      %p238 = scmp.ne.s32.totalorder %s223, %s237
      %p239 = scmp.eq.s32.totalorder %s24, 0
      %p240 = por %p238, %p239
      %s241 = ssub.s32 %s25, %s37
      %s242 = ssub.s32 %s26, %s33
      %s243 = sor.u32 %s241, %s242
      %p244 = scmp.eq.s32.totalorder %s243, 0
      %s246 = sadd.s32 %s245, 1
      %s247 = scalar_select %p244, %s245, %s246
      %p250 = pneg %p244
      %p251 = scmp.eq.s32.totalorder %s18, 1
      %p252 = por %p250, %p251
      %p253 = scmp.ne.s32.totalorder %s245, %s248
      %p254 = scmp.eq.s32.totalorder %s18, 0
      %p255 = por %p253, %p254
      %p256 = scmp.ne.s32.totalorder %s245, %s248
      %p257 = scmp.eq.s32.totalorder %s23, 1
      %p258 = por %p256, %p257
      %p259 = scmp.ne.s32.totalorder %s248, %s249
      %p260 = scmp.eq.s32.totalorder %s23, 0
      %p261 = por %p259, %p260
      %p262 = scmp.ne.s32.totalorder %s248, %s249
      %p263 = scmp.eq.s32.totalorder %s24, 1
      %p264 = por %p262, %p263
      %p266 = scmp.ne.s32.totalorder %s249, %s265
      %p267 = scmp.eq.s32.totalorder %s24, 0
      %p268 = por %p266, %p267
      %p269 = scmp.le.s32.totalorder 1, %s18
      %p270 = scmp.lt.s32.totalorder %s18, 3
      %p271 = pnand %p269, %p270
      %p272 = pneg %p271
      // Predicated region
      $region9: #{spatial_map_forward.1} parent=5 // pred_check
        _
      $region10: #{spatial_map_forward.1} parent=5 // pred_check_branch
        %274 = sbr.rel (%p271) target = $region12
      $region11: #{spatial_map_forward.1} parent=5 // pred_region
        %s275 = ssub.s32 %s18, 1
        // Predicated region
        $region13: #{spatial_map_forward.1} parent=11 // pred_check
          %p276 = pneg %p107
        $region14: #{spatial_map_forward.1} parent=11 // pred_check_branch
          %278 = sbr.rel (%p276) target = $region16
        $region15: #{spatial_map_forward.1} parent=11 // pred_region
          _
        $region16: #{spatial_map_forward.1} parent=11 // pred_fallthru
          _
        // Predicated region
        $region17: #{spatial_map_forward.1} parent=11 // pred_check
          %p279 = pneg %p128
        $region18: #{spatial_map_forward.1} parent=11 // pred_check_branch
          %281 = sbr.rel (%p279) target = $region20
        $region19: #{spatial_map_forward.1} parent=11 // pred_region
          _
        $region20: #{spatial_map_forward.1} parent=11 // pred_fallthru
          _
        // Predicated region
        $region21: #{spatial_map_forward.1} parent=11 // pred_check
          %p282 = pneg %p149
        $region22: #{spatial_map_forward.1} parent=11 // pred_check_branch
          %284 = sbr.rel (%p282) target = $region24
        $region23: #{spatial_map_forward.1} parent=11 // pred_region
          _
        $region24: #{spatial_map_forward.1} parent=11 // pred_fallthru
          _
        // Predicated region
        $region25: #{spatial_map_forward.1} parent=11 // pred_check
          %p285 = pneg %p170
        $region26: #{spatial_map_forward.1} parent=11 // pred_check_branch
          %287 = sbr.rel (%p285) target = $region28
        $region27: #{spatial_map_forward.1} parent=11 // pred_region
          _
        $region28: #{spatial_map_forward.1} parent=11 // pred_fallthru
          _
        // Predicated region
        $region29: #{spatial_map_forward.1} parent=11 // pred_check
          %p288 = pneg %p191
        $region30: #{spatial_map_forward.1} parent=11 // pred_check_branch
          %290 = sbr.rel (%p288) target = $region32
        $region31: #{spatial_map_forward.1} parent=11 // pred_region
          _
        $region32: #{spatial_map_forward.1} parent=11 // pred_fallthru
          _
        // Predicated region
        $region33: #{spatial_map_forward.1} parent=11 // pred_check
          %p291 = pneg %p212
        $region34: #{spatial_map_forward.1} parent=11 // pred_check_branch
          %293 = sbr.rel (%p291) target = $region36
        $region35: #{spatial_map_forward.1} parent=11 // pred_region
          _
        $region36: #{spatial_map_forward.1} parent=11 // pred_fallthru
          _
        // Predicated region
        $region37: #{spatial_map_forward.1} parent=11 // pred_check
          %p294 = pneg %p233
        $region38: #{spatial_map_forward.1} parent=11 // pred_check_branch
          %296 = sbr.rel (%p294) target = $region40
        $region39: #{spatial_map_forward.1} parent=11 // pred_region
          _
        $region40: #{spatial_map_forward.1} parent=11 // pred_fallthru
          _
      $region12: #{spatial_map_forward.1} parent=5 // pred_fallthru
        _
      %p297 = scmp.lt.s32.totalorder %s18, 2
      // Predicated region
      $region41: #{spatial_map_forward.1} parent=5 // pred_check
        %p298 = pneg %p297
      $region42: #{spatial_map_forward.1} parent=5 // pred_check_branch
        %300 = sbr.rel (%p298) target = $region44
      $region43: #{spatial_map_forward.1} parent=5 // pred_region
        // Predicated region
        $region45: #{spatial_map_forward.1} parent=43 // pred_check
          %p301 = pneg %p52
        $region46: #{spatial_map_forward.1} parent=43 // pred_check_branch
          %303 = sbr.rel (%p301) target = $region48
        $region47: #{spatial_map_forward.1} parent=43 // pred_region
          %p304 = scmp.lt.s32.totalorder %s25, 1
          %s305 = scalar_select %p304, %s25, 1
          %p306 = scmp.lt.s32.totalorder %s26, 0
          %s307 = scalar_select %p306, %s26, 0
          %s308 = smul.addr %s305, 2
          %s309 = sadd.s32 %s307, %s308
          %s310 = smul.addr %s309, 8
          %s311 = scalar_lea.vmem %s0, %s310
        $region48: #{spatial_map_forward.1} parent=43 // pred_fallthru
          _
        // Predicated region
        $region49: #{spatial_map_forward.1} parent=43 // pred_check
          %p312 = pneg %p80
        $region50: #{spatial_map_forward.1} parent=43 // pred_check_branch
          %314 = sbr.rel (%p312) target = $region52
        $region51: #{spatial_map_forward.1} parent=43 // pred_region
          %p315 = scmp.lt.s32.totalorder %s25, 1
          %s316 = scalar_select %p315, %s25, 1
          %p317 = scmp.lt.s32.totalorder %s26, 0
          %s318 = scalar_select %p317, %s26, 0
          %s319 = smul.addr %s316, 2
          %s320 = sadd.s32 %s318, %s319
          %s321 = smul.addr %s320, 8
          %s322 = scalar_lea.vmem %s1, %s321
        $region52: #{spatial_map_forward.1} parent=43 // pred_fallthru
          _
      $region44: #{spatial_map_forward.1} parent=5 // pred_fallthru
        _
      %p323 = scmp.le.s32.totalorder 1, %s18
      %p324 = scmp.lt.s32.totalorder %s18, 3
      %p325 = pnand %p323, %p324
      %p326 = pneg %p325
      // Predicated region
      $region53: #{spatial_map_forward.1} parent=5 // pred_check
        _
      $region54: #{spatial_map_forward.1} parent=5 // pred_check_branch
        %328 = sbr.rel (%p325) target = $region56
      $region55: #{spatial_map_forward.1} parent=5 // pred_region
        %s329 = ssub.s32 %s18, 1
        %p330 = scmp.lt.s32.totalorder %s27, 1
        %s331 = scalar_select %p330, %s27, 1
        %p332 = scmp.lt.s32.totalorder %s28, 0
        %s333 = scalar_select %p332, %s28, 0
        %s334 = smul.addr %s331, 2
        %s335 = sadd.s32 %s333, %s334
        %s336 = smul.addr %s335, 8
        %s337 = scalar_lea.vmem %s0, %s336
        %p338 = pneg %p58
        %p339 = pneg %p55
        %p340 = scmp.lt.s32.totalorder %s27, 1
        %s341 = scalar_select %p340, %s27, 1
        %p342 = scmp.lt.s32.totalorder %s28, 0
        %s343 = scalar_select %p342, %s28, 0
        %s344 = smul.addr %s341, 2
        %s345 = sadd.s32 %s343, %s344
        %s346 = smul.addr %s345, 8
        %s347 = scalar_lea.vmem %s1, %s346
        %p348 = pneg %p86
        %p349 = pneg %p83
        %p350 = pneg %p107
        %p351 = pneg %p104
        %p352 = pneg %p128
        %p353 = pneg %p125
        %p354 = pneg %p149
        %p355 = pneg %p146
        %p356 = pneg %p170
        %p357 = pneg %p167
        %p358 = pneg %p191
        %p359 = pneg %p188
        %p360 = pneg %p212
        %p361 = pneg %p209
        %p362 = pneg %p233
        %p363 = pneg %p230
        %p364 = pneg %p261
        %p365 = pneg %p258
        %s366 = sand.u32 %s248, 1
        %s367 = scalar_lea.sflag [#allocation3], %s366
        %s368 = sand.u32 %s248, 1
        %s369 = smul.addr %s368, 32
        %s370 = scalar_lea.vmem [#allocation2], %s369
        %p371 = scmp.lt.s32.totalorder %s27, 1
        %s372 = scalar_select %p371, %s27, 1
        %p373 = scmp.lt.s32.totalorder %s28, 0
        %s374 = scalar_select %p373, %s28, 0
        %s375 = smul.addr %s372, 2
        %s376 = sadd.s32 %s374, %s375
        %s377 = smul.addr %s376, 8
        %s378 = scalar_lea.vmem %s0, %s377
        %p379 = scmp.lt.s32.totalorder %s27, 1
        %s380 = scalar_select %p379, %s27, 1
        %p381 = scmp.lt.s32.totalorder %s28, 0
        %s382 = scalar_select %p381, %s28, 0
        %s383 = smul.addr %s380, 2
        %s384 = sadd.s32 %s382, %s383
        %s385 = smul.addr %s384, 8
        %s386 = scalar_lea.vmem %s1, %s385
        %v387 = vld [vmem:[%s2] sm:$0xff]
        %v388 = vld [vmem:[%s2 + $0x8] sm:$0xff]
        %v389 = vld [vmem:[%s2 + $0x10] sm:$0xff]
        %v390 = vld [vmem:[%s2 + $0x18] sm:$0xff]
        %v391 = vld [vmem:[%s2 + $0x20] sm:$0xff]
        %v392 = vld [vmem:[%s2 + $0x28] sm:$0xff]
        %v393 = vld [vmem:[%s2 + $0x30] sm:$0xff]
        %v394 = vld [vmem:[%s2 + $0x38] sm:$0xff]
        %v395 = vld [vmem:[%s2 + $0x40] sm:$0xff]
        %v396 = vld [vmem:[%s2 + $0x48] sm:$0xff]
        %v397 = vld [vmem:[%s2 + $0x50] sm:$0xff]
        %v398 = vld [vmem:[%s2 + $0x58] sm:$0xff]
        %v399 = vld [vmem:[%s2 + $0x60] sm:$0xff]
        %v400 = vld [vmem:[%s2 + $0x68] sm:$0xff]
        %v401 = vld [vmem:[%s2 + $0x70] sm:$0xff]
        %v402 = vld [vmem:[%s2 + $0x78] sm:$0xff]
        %v403 = vld [vmem:[%s2 + $0x80] sm:$0xff]
        %v404 = vld [vmem:[%s2 + $0x88] sm:$0xff]
        %v405 = vld [vmem:[%s2 + $0x90] sm:$0xff]
        %v406 = vld [vmem:[%s2 + $0x98] sm:$0xff]
        %v407 = vld [vmem:[%s2 + $0xa0] sm:$0xff]
        %v408 = vld [vmem:[%s2 + $0xa8] sm:$0xff]
        %v409 = vld [vmem:[%s2 + $0xb0] sm:$0xff]
        %v410 = vld [vmem:[%s2 + $0xb8] sm:$0xff]
        %v411 = vld [vmem:[%s2 + $0xc0] sm:$0xff]
        %v412 = vld [vmem:[%s2 + $0xc8] sm:$0xff]
        %v413 = vld [vmem:[%s2 + $0xd0] sm:$0xff]
        %v414 = vld [vmem:[%s2 + $0xd8] sm:$0xff]
        %v415 = vld [vmem:[%s2 + $0xe0] sm:$0xff]
        %v416 = vld [vmem:[%s2 + $0xe8] sm:$0xff]
        %v417 = vld [vmem:[%s2 + $0xf0] sm:$0xff]
        %v418 = vld [vmem:[%s2 + $0xf8] sm:$0xff]
        %v419 = vld [vmem:[%s378] sm:$0xff]
        %v420 = vld [vmem:[%s378 + $0x8] sm:$0xff]
        %v421 = vld [vmem:[%s3] sm:$0xff]
        %v422 = vld [vmem:[%s3 + $0x8] sm:$0xff]
        %v423 = vld [vmem:[%s3 + $0x10] sm:$0xff]
        %v424 = vld [vmem:[%s3 + $0x18] sm:$0xff]
        %v425 = vld [vmem:[%s3 + $0x20] sm:$0xff]
        %v426 = vld [vmem:[%s3 + $0x28] sm:$0xff]
        %v427 = vld [vmem:[%s3 + $0x30] sm:$0xff]
        %v428 = vld [vmem:[%s3 + $0x38] sm:$0xff]
        %v429 = vld [vmem:[%s3 + $0x40] sm:$0xff]
        %v430 = vld [vmem:[%s3 + $0x48] sm:$0xff]
        %v431 = vld [vmem:[%s3 + $0x50] sm:$0xff]
        %v432 = vld [vmem:[%s3 + $0x58] sm:$0xff]
        %v433 = vld [vmem:[%s3 + $0x60] sm:$0xff]
        %v434 = vld [vmem:[%s3 + $0x68] sm:$0xff]
        %v435 = vld [vmem:[%s3 + $0x70] sm:$0xff]
        %v436 = vld [vmem:[%s3 + $0x78] sm:$0xff]
        %v437 = vld [vmem:[%s3 + $0x80] sm:$0xff]
        %v438 = vld [vmem:[%s3 + $0x88] sm:$0xff]
        %v439 = vld [vmem:[%s3 + $0x90] sm:$0xff]
        %v440 = vld [vmem:[%s3 + $0x98] sm:$0xff]
        %v441 = vld [vmem:[%s3 + $0xa0] sm:$0xff]
        %v442 = vld [vmem:[%s3 + $0xa8] sm:$0xff]
        %v443 = vld [vmem:[%s3 + $0xb0] sm:$0xff]
        %v444 = vld [vmem:[%s3 + $0xb8] sm:$0xff]
        %v445 = vld [vmem:[%s3 + $0xc0] sm:$0xff]
        %v446 = vld [vmem:[%s3 + $0xc8] sm:$0xff]
        %v447 = vld [vmem:[%s3 + $0xd0] sm:$0xff]
        %v448 = vld [vmem:[%s3 + $0xd8] sm:$0xff]
        %v449 = vld [vmem:[%s3 + $0xe0] sm:$0xff]
        %v450 = vld [vmem:[%s3 + $0xe8] sm:$0xff]
        %v451 = vld [vmem:[%s3 + $0xf0] sm:$0xff]
        %v452 = vld [vmem:[%s3 + $0xf8] sm:$0xff]
        %v453 = vld [vmem:[%s386] sm:$0xff]
        %v454 = vld [vmem:[%s386 + $0x8] sm:$0xff]
        %vm455 = vcmask 130048
        %v457 = vsel %vm455, %v421, 0
        %v460 = vsel %vm455, %v422, 0
        %v463 = vsel %vm455, %v423, 0
        %v466 = vsel %vm455, %v424, 0
        %v469 = vsel %vm455, %v425, 0
        %v472 = vsel %vm455, %v426, 0
        %v475 = vsel %vm455, %v427, 0
        %v478 = vsel %vm455, %v428, 0
        %v481 = vsel %vm455, %v429, 0
        %v484 = vsel %vm455, %v430, 0
        %v487 = vsel %vm455, %v431, 0
        %v490 = vsel %vm455, %v432, 0
        %v493 = vsel %vm455, %v433, 0
        %v496 = vsel %vm455, %v434, 0
        %v499 = vsel %vm455, %v435, 0
        %v502 = vsel %vm455, %v436, 0
        %v505 = vsel %vm455, %v437, 0
        %v508 = vsel %vm455, %v438, 0
        %v511 = vsel %vm455, %v439, 0
        %v514 = vsel %vm455, %v440, 0
        %v517 = vsel %vm455, %v441, 0
        %v520 = vsel %vm455, %v442, 0
        %v523 = vsel %vm455, %v443, 0
        %v526 = vsel %vm455, %v444, 0
        %v529 = vsel %vm455, %v445, 0
        %v532 = vsel %vm455, %v446, 0
        %v535 = vsel %vm455, %v447, 0
        %v538 = vsel %vm455, %v448, 0
        %v541 = vsel %vm455, %v449, 0
        %v544 = vsel %vm455, %v450, 0
        %v547 = vsel %vm455, %v451, 0
        %v550 = vsel %vm455, %v452, 0
        %552 = vmatprep.subr.mxu0 0.0
        %553 = vmatpush1.msra.mxu0 %v453
        %554 = vmatprep.subr.mxu0 0.0
        %555 = vmatpush1.msra.mxu0 %v454
        %556 = vmatprep.subr.mxu0 0.0
        %557 = vmatpush1.msra.mxu0 0.0
        %558 = vmatprep.subr.mxu0 0.0
        %559 = vmatpush1.msra.mxu0 0.0
        %560 = vmatprep.subr.mxu0 0.0
        %561 = vmatpush1.msra.mxu0 0.0
        %562 = vmatprep.subr.mxu0 0.0
        %563 = vmatpush1.msra.mxu0 0.0
        %564 = vmatprep.subr.mxu0 0.0
        %565 = vmatpush1.msra.mxu0 0.0
        %566 = vmatprep.subr.mxu0 0.0
        %567 = vmatpush1.msra.mxu0 0.0
        %568 = vmatprep.subr.mxu0 0.0
        %569 = vmatpush1.msra.mxu0 0.0
        %570 = vmatprep.subr.mxu0 0.0
        %571 = vmatpush1.msra.mxu0 0.0
        %572 = vmatprep.subr.mxu0 0.0
        %573 = vmatpush1.msra.mxu0 0.0
        %574 = vmatprep.subr.mxu0 0.0
        %575 = vmatpush1.msra.mxu0 0.0
        %576 = vmatprep.subr.mxu0 0.0
        %577 = vmatpush1.msra.mxu0 0.0
        %578 = vmatprep.subr.mxu0 0.0
        %579 = vmatpush1.msra.mxu0 0.0
        %580 = vmatprep.subr.mxu0 0.0
        %581 = vmatpush1.msra.mxu0 0.0
        %582 = vmatprep.subr.mxu0 0.0
        %583 = vmatpush1.msra.mxu0 0.0
        %584 = vmatprep.subr.mxu0 0.0
        %585 = vmatpush1.msra.mxu0 0.0
        %586 = vmatprep.subr.mxu0 0.0
        %587 = vmatpush1.msra.mxu0 0.0
        %588 = vmatprep.subr.mxu0 0.0
        %589 = vmatpush1.msra.mxu0 0.0
        %590 = vmatprep.subr.mxu0 0.0
        %591 = vmatpush1.msra.mxu0 0.0
        %592 = vmatprep.subr.mxu0 0.0
        %593 = vmatpush1.msra.mxu0 0.0
        %594 = vmatprep.subr.mxu0 0.0
        %595 = vmatpush1.msra.mxu0 0.0
        %596 = vmatprep.subr.mxu0 0.0
        %597 = vmatpush1.msra.mxu0 0.0
        %598 = vmatprep.subr.mxu0 0.0
        %599 = vmatpush1.msra.mxu0 0.0
        %600 = vmatprep.subr.mxu0 0.0
        %601 = vmatpush1.msra.mxu0 0.0
        %602 = vmatprep.subr.mxu0 0.0
        %603 = vmatpush1.msra.mxu0 0.0
        %604 = vmatprep.subr.mxu0 0.0
        %605 = vmatpush1.msra.mxu0 0.0
        %606 = vmatprep.subr.mxu0 0.0
        %607 = vmatpush1.msra.mxu0 0.0
        %608 = vmatprep.subr.mxu0 0.0
        %609 = vmatpush1.msra.mxu0 0.0
        %610 = vmatprep.subr.mxu0 0.0
        %611 = vmatpush1.msra.mxu0 0.0
        %612 = vmatprep.subr.mxu0 0.0
        %613 = vmatpush1.msra.mxu0 0.0
        %614 = vmatprep.subr.mxu0 0.0
        %615 = vmatpush1.msra.mxu0 0.0
        %616 = vmatprep.mubr.f32.mxu0 0.0
        %617 = vmatmul.mubr.f32.gmra.mrb[0].mxu0 %v457
        %v618 = vpop.f32.mrb[0].mxu0
        %v619 = vadd.f32 0.0, %v618
        %v620 = vpop.f32.mrb[0].mxu0
        %621 = vmatprep.mubr.f32.mxu0 0.0
        %622 = vmatmul.mubr.f32.gmra.mrb[0].mxu0 %v460
        %v623 = vpop.f32.mrb[0].mxu0
        %v624 = vadd.f32 0.0, %v623
        %v625 = vpop.f32.mrb[0].mxu0
        %626 = vmatprep.mubr.f32.mxu0 0.0
        %627 = vmatmul.mubr.f32.gmra.mrb[0].mxu0 %v463
        %v628 = vpop.f32.mrb[0].mxu0
        %v629 = vadd.f32 0.0, %v628
        %v630 = vpop.f32.mrb[0].mxu0
        %631 = vmatprep.mubr.f32.mxu0 0.0
        %632 = vmatmul.mubr.f32.gmra.mrb[0].mxu0 %v466
        %v633 = vpop.f32.mrb[0].mxu0
        %v634 = vadd.f32 0.0, %v633
        %v635 = vpop.f32.mrb[0].mxu0
        %636 = vmatprep.mubr.f32.mxu0 0.0
        %637 = vmatmul.mubr.f32.gmra.mrb[0].mxu0 %v469
        %v638 = vpop.f32.mrb[0].mxu0
        %v639 = vadd.f32 0.0, %v638
        %v640 = vpop.f32.mrb[0].mxu0
        %641 = vmatprep.mubr.f32.mxu0 0.0
        %642 = vmatmul.mubr.f32.gmra.mrb[0].mxu0 %v472
        %v643 = vpop.f32.mrb[0].mxu0
        %v644 = vadd.f32 0.0, %v643
        %v645 = vpop.f32.mrb[0].mxu0
        %646 = vmatprep.mubr.f32.mxu0 0.0
        %647 = vmatmul.mubr.f32.gmra.mrb[0].mxu0 %v475
        %v648 = vpop.f32.mrb[0].mxu0
        %v649 = vadd.f32 0.0, %v648
        %v650 = vpop.f32.mrb[0].mxu0
        %651 = vmatprep.mubr.f32.mxu0 0.0
        %652 = vmatmul.mubr.f32.gmra.mrb[0].mxu0 %v478
        %v653 = vpop.f32.mrb[0].mxu0
        %v654 = vadd.f32 0.0, %v653
        %v655 = vpop.f32.mrb[0].mxu0
        %656 = vmatprep.mubr.f32.mxu0 0.0
        %657 = vmatmul.mubr.f32.gmra.mrb[0].mxu0 %v481
        %v658 = vpop.f32.mrb[0].mxu0
        %v659 = vadd.f32 0.0, %v658
        %v660 = vpop.f32.mrb[0].mxu0
        %661 = vmatprep.mubr.f32.mxu0 0.0
        %662 = vmatmul.mubr.f32.gmra.mrb[0].mxu0 %v484
        %v663 = vpop.f32.mrb[0].mxu0
        %v664 = vadd.f32 0.0, %v663
        %v665 = vpop.f32.mrb[0].mxu0
        %666 = vmatprep.mubr.f32.mxu0 0.0
        %667 = vmatmul.mubr.f32.gmra.mrb[0].mxu0 %v487
        %v668 = vpop.f32.mrb[0].mxu0
        %v669 = vadd.f32 0.0, %v668
        %v670 = vpop.f32.mrb[0].mxu0
        %671 = vmatprep.mubr.f32.mxu0 0.0
        %672 = vmatmul.mubr.f32.gmra.mrb[0].mxu0 %v490
        %v673 = vpop.f32.mrb[0].mxu0
        %v674 = vadd.f32 0.0, %v673
        %v675 = vpop.f32.mrb[0].mxu0
        %676 = vmatprep.mubr.f32.mxu0 0.0
        %677 = vmatmul.mubr.f32.gmra.mrb[0].mxu0 %v493
        %v678 = vpop.f32.mrb[0].mxu0
        %v679 = vadd.f32 0.0, %v678
        %v680 = vpop.f32.mrb[0].mxu0
        %681 = vmatprep.mubr.f32.mxu0 0.0
        %682 = vmatmul.mubr.f32.gmra.mrb[0].mxu0 %v496
        %v683 = vpop.f32.mrb[0].mxu0
        %v684 = vadd.f32 0.0, %v683
        %v685 = vpop.f32.mrb[0].mxu0
        %686 = vmatprep.mubr.f32.mxu0 0.0
        %687 = vmatmul.mubr.f32.gmra.mrb[0].mxu0 %v499
        %v688 = vpop.f32.mrb[0].mxu0
        %v689 = vadd.f32 0.0, %v688
        %v690 = vpop.f32.mrb[0].mxu0
        %691 = vmatprep.mubr.f32.mxu0 0.0
        %692 = vmatmul.mubr.f32.gmra.mrb[0].mxu0 %v502
        %v693 = vpop.f32.mrb[0].mxu0
        %v694 = vadd.f32 0.0, %v693
        %v695 = vpop.f32.mrb[0].mxu0
        %696 = vmatprep.mubr.f32.mxu0 0.0
        %697 = vmatmul.mubr.f32.gmra.mrb[0].mxu0 %v505
        %v698 = vpop.f32.mrb[0].mxu0
        %v699 = vadd.f32 0.0, %v698
        %v700 = vpop.f32.mrb[0].mxu0
        %701 = vmatprep.mubr.f32.mxu0 0.0
        %702 = vmatmul.mubr.f32.gmra.mrb[0].mxu0 %v508
        %v703 = vpop.f32.mrb[0].mxu0
        %v704 = vadd.f32 0.0, %v703
        %v705 = vpop.f32.mrb[0].mxu0
        %706 = vmatprep.mubr.f32.mxu0 0.0
        %707 = vmatmul.mubr.f32.gmra.mrb[0].mxu0 %v511
        %v708 = vpop.f32.mrb[0].mxu0
        %v709 = vadd.f32 0.0, %v708
        %v710 = vpop.f32.mrb[0].mxu0
        %711 = vmatprep.mubr.f32.mxu0 0.0
        %712 = vmatmul.mubr.f32.gmra.mrb[0].mxu0 %v514
        %v713 = vpop.f32.mrb[0].mxu0
        %v714 = vadd.f32 0.0, %v713
        %v715 = vpop.f32.mrb[0].mxu0
        %716 = vmatprep.mubr.f32.mxu0 0.0
        %717 = vmatmul.mubr.f32.gmra.mrb[0].mxu0 %v517
        %v718 = vpop.f32.mrb[0].mxu0
        %v719 = vadd.f32 0.0, %v718
        %v720 = vpop.f32.mrb[0].mxu0
        %721 = vmatprep.mubr.f32.mxu0 0.0
        %722 = vmatmul.mubr.f32.gmra.mrb[0].mxu0 %v520
        %v723 = vpop.f32.mrb[0].mxu0
        %v724 = vadd.f32 0.0, %v723
        %v725 = vpop.f32.mrb[0].mxu0
        %726 = vmatprep.mubr.f32.mxu0 0.0
        %727 = vmatmul.mubr.f32.gmra.mrb[0].mxu0 %v523
        %v728 = vpop.f32.mrb[0].mxu0
        %v729 = vadd.f32 0.0, %v728
        %v730 = vpop.f32.mrb[0].mxu0
        %731 = vmatprep.mubr.f32.mxu0 0.0
        %732 = vmatmul.mubr.f32.gmra.mrb[0].mxu0 %v526
        %v733 = vpop.f32.mrb[0].mxu0
        %v734 = vadd.f32 0.0, %v733
        %v735 = vpop.f32.mrb[0].mxu0
        %736 = vmatprep.mubr.f32.mxu0 0.0
        %737 = vmatmul.mubr.f32.gmra.mrb[0].mxu0 %v529
        %v738 = vpop.f32.mrb[0].mxu0
        %v739 = vadd.f32 0.0, %v738
        %v740 = vpop.f32.mrb[0].mxu0
        %741 = vmatprep.mubr.f32.mxu0 0.0
        %742 = vmatmul.mubr.f32.gmra.mrb[0].mxu0 %v532
        %v743 = vpop.f32.mrb[0].mxu0
        %v744 = vadd.f32 0.0, %v743
        %v745 = vpop.f32.mrb[0].mxu0
        %746 = vmatprep.mubr.f32.mxu0 0.0
        %747 = vmatmul.mubr.f32.gmra.mrb[0].mxu0 %v535
        %v748 = vpop.f32.mrb[0].mxu0
        %v749 = vadd.f32 0.0, %v748
        %v750 = vpop.f32.mrb[0].mxu0
        %751 = vmatprep.mubr.f32.mxu0 0.0
        %752 = vmatmul.mubr.f32.gmra.mrb[0].mxu0 %v538
        %v753 = vpop.f32.mrb[0].mxu0
        %v754 = vadd.f32 0.0, %v753
        %v755 = vpop.f32.mrb[0].mxu0
        %756 = vmatprep.mubr.f32.mxu0 0.0
        %757 = vmatmul.mubr.f32.gmra.mrb[0].mxu0 %v541
        %v758 = vpop.f32.mrb[0].mxu0
        %v759 = vadd.f32 0.0, %v758
        %v760 = vpop.f32.mrb[0].mxu0
        %761 = vmatprep.mubr.f32.mxu0 0.0
        %762 = vmatmul.mubr.f32.gmra.mrb[0].mxu0 %v544
        %v763 = vpop.f32.mrb[0].mxu0
        %v764 = vadd.f32 0.0, %v763
        %v765 = vpop.f32.mrb[0].mxu0
        %766 = vmatprep.mubr.f32.mxu0 0.0
        %767 = vmatmul.mubr.f32.gmra.mrb[0].mxu0 %v547
        %v768 = vpop.f32.mrb[0].mxu0
        %v769 = vadd.f32 0.0, %v768
        %v770 = vpop.f32.mrb[0].mxu0
        %771 = vmatprep.mubr.f32.mxu0 0.0
        %772 = vmatmul.mubr.f32.gmra.mrb[0].mxu0 %v550
        %v773 = vpop.f32.mrb[0].mxu0
        %v774 = vadd.f32 0.0, %v773
        %v775 = vpop.f32.mrb[0].mxu0
        %776 = vdwg.mxu0
        %v778 = vsel %vm455, %v387, 0
        %v781 = vsel %vm455, %v388, 0
        %v784 = vsel %vm455, %v389, 0
        %v787 = vsel %vm455, %v390, 0
        %v790 = vsel %vm455, %v391, 0
        %v793 = vsel %vm455, %v392, 0
        %v796 = vsel %vm455, %v393, 0
        %v799 = vsel %vm455, %v394, 0
        %v802 = vsel %vm455, %v395, 0
        %v805 = vsel %vm455, %v396, 0
        %v808 = vsel %vm455, %v397, 0
        %v811 = vsel %vm455, %v398, 0
        %v814 = vsel %vm455, %v399, 0
        %v817 = vsel %vm455, %v400, 0
        %v820 = vsel %vm455, %v401, 0
        %v823 = vsel %vm455, %v402, 0
        %v826 = vsel %vm455, %v403, 0
        %v829 = vsel %vm455, %v404, 0
        %v832 = vsel %vm455, %v405, 0
        %v835 = vsel %vm455, %v406, 0
        %v838 = vsel %vm455, %v407, 0
        %v841 = vsel %vm455, %v408, 0
        %v844 = vsel %vm455, %v409, 0
        %v847 = vsel %vm455, %v410, 0
        %v850 = vsel %vm455, %v411, 0
        %v853 = vsel %vm455, %v412, 0
        %v856 = vsel %vm455, %v413, 0
        %v859 = vsel %vm455, %v414, 0
        %v862 = vsel %vm455, %v415, 0
        %v865 = vsel %vm455, %v416, 0
        %v868 = vsel %vm455, %v417, 0
        %v871 = vsel %vm455, %v418, 0
        %873 = vmatprep.subr.mxu0 0.0
        %874 = vmatpush1.msra.mxu0 %v419
        %875 = vmatprep.subr.mxu0 0.0
        %876 = vmatpush1.msra.mxu0 %v420
        %877 = vmatprep.subr.mxu0 0.0
        %878 = vmatpush1.msra.mxu0 0.0
        %879 = vmatprep.subr.mxu0 0.0
        %880 = vmatpush1.msra.mxu0 0.0
        %881 = vmatprep.subr.mxu0 0.0
        %882 = vmatpush1.msra.mxu0 0.0
        %883 = vmatprep.subr.mxu0 0.0
        %884 = vmatpush1.msra.mxu0 0.0
        %885 = vmatprep.subr.mxu0 0.0
        %886 = vmatpush1.msra.mxu0 0.0
        %887 = vmatprep.subr.mxu0 0.0
        %888 = vmatpush1.msra.mxu0 0.0
        %889 = vmatprep.subr.mxu0 0.0
        %890 = vmatpush1.msra.mxu0 0.0
        %891 = vmatprep.subr.mxu0 0.0
        %892 = vmatpush1.msra.mxu0 0.0
        %893 = vmatprep.subr.mxu0 0.0
        %894 = vmatpush1.msra.mxu0 0.0
        %895 = vmatprep.subr.mxu0 0.0
        %896 = vmatpush1.msra.mxu0 0.0
        %897 = vmatprep.subr.mxu0 0.0
        %898 = vmatpush1.msra.mxu0 0.0
        %899 = vmatprep.subr.mxu0 0.0
        %900 = vmatpush1.msra.mxu0 0.0
        %901 = vmatprep.subr.mxu0 0.0
        %902 = vmatpush1.msra.mxu0 0.0
        %903 = vmatprep.subr.mxu0 0.0
        %904 = vmatpush1.msra.mxu0 0.0
        %905 = vmatprep.subr.mxu0 0.0
        %906 = vmatpush1.msra.mxu0 0.0
        %907 = vmatprep.subr.mxu0 0.0
        %908 = vmatpush1.msra.mxu0 0.0
        %909 = vmatprep.subr.mxu0 0.0
        %910 = vmatpush1.msra.mxu0 0.0
        %911 = vmatprep.subr.mxu0 0.0
        %912 = vmatpush1.msra.mxu0 0.0
        %913 = vmatprep.subr.mxu0 0.0
        %914 = vmatpush1.msra.mxu0 0.0
        %915 = vmatprep.subr.mxu0 0.0
        %916 = vmatpush1.msra.mxu0 0.0
        %917 = vmatprep.subr.mxu0 0.0
        %918 = vmatpush1.msra.mxu0 0.0
        %919 = vmatprep.subr.mxu0 0.0
        %920 = vmatpush1.msra.mxu0 0.0
        %921 = vmatprep.subr.mxu0 0.0
        %922 = vmatpush1.msra.mxu0 0.0
        %923 = vmatprep.subr.mxu0 0.0
        %924 = vmatpush1.msra.mxu0 0.0
        %925 = vmatprep.subr.mxu0 0.0
        %926 = vmatpush1.msra.mxu0 0.0
        %927 = vmatprep.subr.mxu0 0.0
        %928 = vmatpush1.msra.mxu0 0.0
        %929 = vmatprep.subr.mxu0 0.0
        %930 = vmatpush1.msra.mxu0 0.0
        %931 = vmatprep.subr.mxu0 0.0
        %932 = vmatpush1.msra.mxu0 0.0
        %933 = vmatprep.subr.mxu0 0.0
        %934 = vmatpush1.msra.mxu0 0.0
        %935 = vmatprep.subr.mxu0 0.0
        %936 = vmatpush1.msra.mxu0 0.0
        %937 = vmatprep.mubr.f32.mxu0 0.0
        %938 = vmatmul.mubr.f32.gmra.mrb[0].mxu0 %v778
        %v939 = vpop.f32.mrb[0].mxu0
        %v940 = vadd.f32 %v619, %v939
        %v941 = vpop.f32.mrb[0].mxu0
        %942 = vmatprep.mubr.f32.mxu0 0.0
        %943 = vmatmul.mubr.f32.gmra.mrb[0].mxu0 %v781
        %v944 = vpop.f32.mrb[0].mxu0
        %v945 = vadd.f32 %v624, %v944
        %v946 = vpop.f32.mrb[0].mxu0
        %947 = vmatprep.mubr.f32.mxu0 0.0
        %948 = vmatmul.mubr.f32.gmra.mrb[0].mxu0 %v784
        %v949 = vpop.f32.mrb[0].mxu0
        %v950 = vadd.f32 %v629, %v949
        %v951 = vpop.f32.mrb[0].mxu0
        %952 = vmatprep.mubr.f32.mxu0 0.0
        %953 = vmatmul.mubr.f32.gmra.mrb[0].mxu0 %v787
        %v954 = vpop.f32.mrb[0].mxu0
        %v955 = vadd.f32 %v634, %v954
        %v956 = vpop.f32.mrb[0].mxu0
        %957 = vmatprep.mubr.f32.mxu0 0.0
        %958 = vmatmul.mubr.f32.gmra.mrb[0].mxu0 %v790
        %v959 = vpop.f32.mrb[0].mxu0
        %v960 = vadd.f32 %v639, %v959
        %v961 = vpop.f32.mrb[0].mxu0
        %962 = vmatprep.mubr.f32.mxu0 0.0
        %963 = vmatmul.mubr.f32.gmra.mrb[0].mxu0 %v793
        %v964 = vpop.f32.mrb[0].mxu0
        %v965 = vadd.f32 %v644, %v964
        %v966 = vpop.f32.mrb[0].mxu0
        %967 = vmatprep.mubr.f32.mxu0 0.0
        %968 = vmatmul.mubr.f32.gmra.mrb[0].mxu0 %v796
        %v969 = vpop.f32.mrb[0].mxu0
        %v970 = vadd.f32 %v649, %v969
        %v971 = vpop.f32.mrb[0].mxu0
        %972 = vmatprep.mubr.f32.mxu0 0.0
        %973 = vmatmul.mubr.f32.gmra.mrb[0].mxu0 %v799
        %v974 = vpop.f32.mrb[0].mxu0
        %v975 = vadd.f32 %v654, %v974
        %v976 = vpop.f32.mrb[0].mxu0
        %977 = vmatprep.mubr.f32.mxu0 0.0
        %978 = vmatmul.mubr.f32.gmra.mrb[0].mxu0 %v802
        %v979 = vpop.f32.mrb[0].mxu0
        %v980 = vadd.f32 %v659, %v979
        %v981 = vpop.f32.mrb[0].mxu0
        %982 = vmatprep.mubr.f32.mxu0 0.0
        %983 = vmatmul.mubr.f32.gmra.mrb[0].mxu0 %v805
        %v984 = vpop.f32.mrb[0].mxu0
        %v985 = vadd.f32 %v664, %v984
        %v986 = vpop.f32.mrb[0].mxu0
        %987 = vmatprep.mubr.f32.mxu0 0.0
        %988 = vmatmul.mubr.f32.gmra.mrb[0].mxu0 %v808
        %v989 = vpop.f32.mrb[0].mxu0
        %v990 = vadd.f32 %v669, %v989
        %v991 = vpop.f32.mrb[0].mxu0
        %992 = vmatprep.mubr.f32.mxu0 0.0
        %993 = vmatmul.mubr.f32.gmra.mrb[0].mxu0 %v811
        %v994 = vpop.f32.mrb[0].mxu0
        %v995 = vadd.f32 %v674, %v994
        %v996 = vpop.f32.mrb[0].mxu0
        %997 = vmatprep.mubr.f32.mxu0 0.0
        %998 = vmatmul.mubr.f32.gmra.mrb[0].mxu0 %v814
        %v999 = vpop.f32.mrb[0].mxu0
        %v1000 = vadd.f32 %v679, %v999
        %v1001 = vpop.f32.mrb[0].mxu0
        %1002 = vmatprep.mubr.f32.mxu0 0.0
        %1003 = vmatmul.mubr.f32.gmra.mrb[0].mxu0 %v817
        %v1004 = vpop.f32.mrb[0].mxu0
        %v1005 = vadd.f32 %v684, %v1004
        %v1006 = vpop.f32.mrb[0].mxu0
        %1007 = vmatprep.mubr.f32.mxu0 0.0
        %1008 = vmatmul.mubr.f32.gmra.mrb[0].mxu0 %v820
        %v1009 = vpop.f32.mrb[0].mxu0
        %v1010 = vadd.f32 %v689, %v1009
        %v1011 = vpop.f32.mrb[0].mxu0
        %1012 = vmatprep.mubr.f32.mxu0 0.0
        %1013 = vmatmul.mubr.f32.gmra.mrb[0].mxu0 %v823
        %v1014 = vpop.f32.mrb[0].mxu0
        %v1015 = vadd.f32 %v694, %v1014
        %v1016 = vpop.f32.mrb[0].mxu0
        %1017 = vmatprep.mubr.f32.mxu0 0.0
        %1018 = vmatmul.mubr.f32.gmra.mrb[0].mxu0 %v826
        %v1019 = vpop.f32.mrb[0].mxu0
        %v1020 = vadd.f32 %v699, %v1019
        %v1021 = vpop.f32.mrb[0].mxu0
        %1022 = vmatprep.mubr.f32.mxu0 0.0
        %1023 = vmatmul.mubr.f32.gmra.mrb[0].mxu0 %v829
        %v1024 = vpop.f32.mrb[0].mxu0
        %v1025 = vadd.f32 %v704, %v1024
        %v1026 = vpop.f32.mrb[0].mxu0
        %1027 = vmatprep.mubr.f32.mxu0 0.0
        %1028 = vmatmul.mubr.f32.gmra.mrb[0].mxu0 %v832
        %v1029 = vpop.f32.mrb[0].mxu0
        %v1030 = vadd.f32 %v709, %v1029
        %v1031 = vpop.f32.mrb[0].mxu0
        %1032 = vmatprep.mubr.f32.mxu0 0.0
        %1033 = vmatmul.mubr.f32.gmra.mrb[0].mxu0 %v835
        %v1034 = vpop.f32.mrb[0].mxu0
        %v1035 = vadd.f32 %v714, %v1034
        %v1036 = vpop.f32.mrb[0].mxu0
        %1037 = vmatprep.mubr.f32.mxu0 0.0
        %1038 = vmatmul.mubr.f32.gmra.mrb[0].mxu0 %v838
        %v1039 = vpop.f32.mrb[0].mxu0
        %v1040 = vadd.f32 %v719, %v1039
        %v1041 = vpop.f32.mrb[0].mxu0
        %1042 = vmatprep.mubr.f32.mxu0 0.0
        %1043 = vmatmul.mubr.f32.gmra.mrb[0].mxu0 %v841
        %v1044 = vpop.f32.mrb[0].mxu0
        %v1045 = vadd.f32 %v724, %v1044
        %v1046 = vpop.f32.mrb[0].mxu0
        %1047 = vmatprep.mubr.f32.mxu0 0.0
        %1048 = vmatmul.mubr.f32.gmra.mrb[0].mxu0 %v844
        %v1049 = vpop.f32.mrb[0].mxu0
        %v1050 = vadd.f32 %v729, %v1049
        %v1051 = vpop.f32.mrb[0].mxu0
        %1052 = vmatprep.mubr.f32.mxu0 0.0
        %1053 = vmatmul.mubr.f32.gmra.mrb[0].mxu0 %v847
        %v1054 = vpop.f32.mrb[0].mxu0
        %v1055 = vadd.f32 %v734, %v1054
        %v1056 = vpop.f32.mrb[0].mxu0
        %1057 = vmatprep.mubr.f32.mxu0 0.0
        %1058 = vmatmul.mubr.f32.gmra.mrb[0].mxu0 %v850
        %v1059 = vpop.f32.mrb[0].mxu0
        %v1060 = vadd.f32 %v739, %v1059
        %v1061 = vpop.f32.mrb[0].mxu0
        %1062 = vmatprep.mubr.f32.mxu0 0.0
        %1063 = vmatmul.mubr.f32.gmra.mrb[0].mxu0 %v853
        %v1064 = vpop.f32.mrb[0].mxu0
        %v1065 = vadd.f32 %v744, %v1064
        %v1066 = vpop.f32.mrb[0].mxu0
        %1067 = vmatprep.mubr.f32.mxu0 0.0
        %1068 = vmatmul.mubr.f32.gmra.mrb[0].mxu0 %v856
        %v1069 = vpop.f32.mrb[0].mxu0
        %v1070 = vadd.f32 %v749, %v1069
        %v1071 = vpop.f32.mrb[0].mxu0
        %1072 = vmatprep.mubr.f32.mxu0 0.0
        %1073 = vmatmul.mubr.f32.gmra.mrb[0].mxu0 %v859
        %v1074 = vpop.f32.mrb[0].mxu0
        %v1075 = vadd.f32 %v754, %v1074
        %v1076 = vpop.f32.mrb[0].mxu0
        %1077 = vmatprep.mubr.f32.mxu0 0.0
        %1078 = vmatmul.mubr.f32.gmra.mrb[0].mxu0 %v862
        %v1079 = vpop.f32.mrb[0].mxu0
        %v1080 = vadd.f32 %v759, %v1079
        %v1081 = vpop.f32.mrb[0].mxu0
        %1082 = vmatprep.mubr.f32.mxu0 0.0
        %1083 = vmatmul.mubr.f32.gmra.mrb[0].mxu0 %v865
        %v1084 = vpop.f32.mrb[0].mxu0
        %v1085 = vadd.f32 %v764, %v1084
        %v1086 = vpop.f32.mrb[0].mxu0
        %1087 = vmatprep.mubr.f32.mxu0 0.0
        %1088 = vmatmul.mubr.f32.gmra.mrb[0].mxu0 %v868
        %v1089 = vpop.f32.mrb[0].mxu0
        %v1090 = vadd.f32 %v769, %v1089
        %v1091 = vpop.f32.mrb[0].mxu0
        %1092 = vmatprep.mubr.f32.mxu0 0.0
        %1093 = vmatmul.mubr.f32.gmra.mrb[0].mxu0 %v871
        %v1094 = vpop.f32.mrb[0].mxu0
        %v1095 = vadd.f32 %v774, %v1094
        %v1096 = vpop.f32.mrb[0].mxu0
        %1097 = vdwg.mxu0
        %v1098 = vld [vmem:[%s4] sm:$0xff]
        %v1099 = vld [vmem:[%s4 + $0x8] sm:$0xff]
        %v1100 = vld [vmem:[%s4 + $0x10] sm:$0xff]
        %v1101 = vld [vmem:[%s4 + $0x18] sm:$0xff]
        %v1102 = vld [vmem:[%s4 + $0x20] sm:$0xff]
        %v1103 = vld [vmem:[%s4 + $0x28] sm:$0xff]
        %v1104 = vld [vmem:[%s4 + $0x30] sm:$0xff]
        %v1105 = vld [vmem:[%s4 + $0x38] sm:$0xff]
        %v1106 = vld [vmem:[%s4 + $0x40] sm:$0xff]
        %v1107 = vld [vmem:[%s4 + $0x48] sm:$0xff]
        %v1108 = vld [vmem:[%s4 + $0x50] sm:$0xff]
        %v1109 = vld [vmem:[%s4 + $0x58] sm:$0xff]
        %v1110 = vld [vmem:[%s4 + $0x60] sm:$0xff]
        %v1111 = vld [vmem:[%s4 + $0x68] sm:$0xff]
        %v1112 = vld [vmem:[%s4 + $0x70] sm:$0xff]
        %v1113 = vld [vmem:[%s4 + $0x78] sm:$0xff]
        %v1114 = vld [vmem:[%s4 + $0x80] sm:$0xff]
        %v1115 = vld [vmem:[%s4 + $0x88] sm:$0xff]
        %v1116 = vld [vmem:[%s4 + $0x90] sm:$0xff]
        %v1117 = vld [vmem:[%s4 + $0x98] sm:$0xff]
        %v1118 = vld [vmem:[%s4 + $0xa0] sm:$0xff]
        %v1119 = vld [vmem:[%s4 + $0xa8] sm:$0xff]
        %v1120 = vld [vmem:[%s4 + $0xb0] sm:$0xff]
        %v1121 = vld [vmem:[%s4 + $0xb8] sm:$0xff]
        %v1122 = vld [vmem:[%s4 + $0xc0] sm:$0xff]
        %v1123 = vld [vmem:[%s4 + $0xc8] sm:$0xff]
        %v1124 = vld [vmem:[%s4 + $0xd0] sm:$0xff]
        %v1125 = vld [vmem:[%s4 + $0xd8] sm:$0xff]
        %v1126 = vld [vmem:[%s4 + $0xe0] sm:$0xff]
        %v1127 = vld [vmem:[%s4 + $0xe8] sm:$0xff]
        %v1128 = vld [vmem:[%s4 + $0xf0] sm:$0xff]
        %v1129 = vld [vmem:[%s4 + $0xf8] sm:$0xff]
        %1131 = vset.pattern.permute.xlu0 0
        %1132 = vperm.xlu0 %1131, %v1098
        %v1133 = vpop.permute.xlu0 %1132
        %1136 = vset.pattern.permute.xlu0 0
        %1137 = vperm.xlu0 %1136, %v1099
        %v1138 = vpop.permute.xlu0 %1137
        %1141 = vset.pattern.permute.xlu0 0
        %1142 = vperm.xlu0 %1141, %v1100
        %v1143 = vpop.permute.xlu0 %1142
        %1146 = vset.pattern.permute.xlu0 0
        %1147 = vperm.xlu0 %1146, %v1101
        %v1148 = vpop.permute.xlu0 %1147
        %1151 = vset.pattern.permute.xlu0 0
        %1152 = vperm.xlu0 %1151, %v1102
        %v1153 = vpop.permute.xlu0 %1152
        %1156 = vset.pattern.permute.xlu0 0
        %1157 = vperm.xlu0 %1156, %v1103
        %v1158 = vpop.permute.xlu0 %1157
        %1161 = vset.pattern.permute.xlu0 0
        %1162 = vperm.xlu0 %1161, %v1104
        %v1163 = vpop.permute.xlu0 %1162
        %1166 = vset.pattern.permute.xlu0 0
        %1167 = vperm.xlu0 %1166, %v1105
        %v1168 = vpop.permute.xlu0 %1167
        %1171 = vset.pattern.permute.xlu0 0
        %1172 = vperm.xlu0 %1171, %v1106
        %v1173 = vpop.permute.xlu0 %1172
        %1176 = vset.pattern.permute.xlu0 0
        %1177 = vperm.xlu0 %1176, %v1107
        %v1178 = vpop.permute.xlu0 %1177
        %1181 = vset.pattern.permute.xlu0 0
        %1182 = vperm.xlu0 %1181, %v1108
        %v1183 = vpop.permute.xlu0 %1182
        %1186 = vset.pattern.permute.xlu0 0
        %1187 = vperm.xlu0 %1186, %v1109
        %v1188 = vpop.permute.xlu0 %1187
        %1191 = vset.pattern.permute.xlu0 0
        %1192 = vperm.xlu0 %1191, %v1110
        %v1193 = vpop.permute.xlu0 %1192
        %1196 = vset.pattern.permute.xlu0 0
        %1197 = vperm.xlu0 %1196, %v1111
        %v1198 = vpop.permute.xlu0 %1197
        %1201 = vset.pattern.permute.xlu0 0
        %1202 = vperm.xlu0 %1201, %v1112
        %v1203 = vpop.permute.xlu0 %1202
        %1206 = vset.pattern.permute.xlu0 0
        %1207 = vperm.xlu0 %1206, %v1113
        %v1208 = vpop.permute.xlu0 %1207
        %1211 = vset.pattern.permute.xlu0 0
        %1212 = vperm.xlu0 %1211, %v1114
        %v1213 = vpop.permute.xlu0 %1212
        %1216 = vset.pattern.permute.xlu0 0
        %1217 = vperm.xlu0 %1216, %v1115
        %v1218 = vpop.permute.xlu0 %1217
        %1221 = vset.pattern.permute.xlu0 0
        %1222 = vperm.xlu0 %1221, %v1116
        %v1223 = vpop.permute.xlu0 %1222
        %1226 = vset.pattern.permute.xlu0 0
        %1227 = vperm.xlu0 %1226, %v1117
        %v1228 = vpop.permute.xlu0 %1227
        %1231 = vset.pattern.permute.xlu0 0
        %1232 = vperm.xlu0 %1231, %v1118
        %v1233 = vpop.permute.xlu0 %1232
        %1236 = vset.pattern.permute.xlu0 0
        %1237 = vperm.xlu0 %1236, %v1119
        %v1238 = vpop.permute.xlu0 %1237
        %1241 = vset.pattern.permute.xlu0 0
        %1242 = vperm.xlu0 %1241, %v1120
        %v1243 = vpop.permute.xlu0 %1242
        %1246 = vset.pattern.permute.xlu0 0
        %1247 = vperm.xlu0 %1246, %v1121
        %v1248 = vpop.permute.xlu0 %1247
        %1251 = vset.pattern.permute.xlu0 0
        %1252 = vperm.xlu0 %1251, %v1122
        %v1253 = vpop.permute.xlu0 %1252
        %1256 = vset.pattern.permute.xlu0 0
        %1257 = vperm.xlu0 %1256, %v1123
        %v1258 = vpop.permute.xlu0 %1257
        %1261 = vset.pattern.permute.xlu0 0
        %1262 = vperm.xlu0 %1261, %v1124
        %v1263 = vpop.permute.xlu0 %1262
        %1266 = vset.pattern.permute.xlu0 0
        %1267 = vperm.xlu0 %1266, %v1125
        %v1268 = vpop.permute.xlu0 %1267
        %1271 = vset.pattern.permute.xlu0 0
        %1272 = vperm.xlu0 %1271, %v1126
        %v1273 = vpop.permute.xlu0 %1272
        %1276 = vset.pattern.permute.xlu0 0
        %1277 = vperm.xlu0 %1276, %v1127
        %v1278 = vpop.permute.xlu0 %1277
        %1281 = vset.pattern.permute.xlu0 0
        %1282 = vperm.xlu0 %1281, %v1128
        %v1283 = vpop.permute.xlu0 %1282
        %1286 = vset.pattern.permute.xlu0 0
        %1287 = vperm.xlu0 %1286, %v1129
        %v1288 = vpop.permute.xlu0 %1287
        %v1290 = vadd.f32 %v940, %v1133
        %v1291 = vadd.f32 %v945, %v1138
        %v1292 = vadd.f32 %v950, %v1143
        %v1293 = vadd.f32 %v955, %v1148
        %v1294 = vadd.f32 %v960, %v1153
        %v1295 = vadd.f32 %v965, %v1158
        %v1296 = vadd.f32 %v970, %v1163
        %v1297 = vadd.f32 %v975, %v1168
        %v1298 = vadd.f32 %v980, %v1173
        %v1299 = vadd.f32 %v985, %v1178
        %v1300 = vadd.f32 %v990, %v1183
        %v1301 = vadd.f32 %v995, %v1188
        %v1302 = vadd.f32 %v1000, %v1193
        %v1303 = vadd.f32 %v1005, %v1198
        %v1304 = vadd.f32 %v1010, %v1203
        %v1305 = vadd.f32 %v1015, %v1208
        %v1306 = vadd.f32 %v1020, %v1213
        %v1307 = vadd.f32 %v1025, %v1218
        %v1308 = vadd.f32 %v1030, %v1223
        %v1309 = vadd.f32 %v1035, %v1228
        %v1310 = vadd.f32 %v1040, %v1233
        %v1311 = vadd.f32 %v1045, %v1238
        %v1312 = vadd.f32 %v1050, %v1243
        %v1313 = vadd.f32 %v1055, %v1248
        %v1314 = vadd.f32 %v1060, %v1253
        %v1315 = vadd.f32 %v1065, %v1258
        %v1316 = vadd.f32 %v1070, %v1263
        %v1317 = vadd.f32 %v1075, %v1268
        %v1318 = vadd.f32 %v1080, %v1273
        %v1319 = vadd.f32 %v1085, %v1278
        %v1320 = vadd.f32 %v1090, %v1283
        %v1321 = vadd.f32 %v1095, %v1288
        %v1322 = vmul.f32 %v1290, 0.01
        %v1323 = vmul.f32 %v1291, 0.01
        %v1324 = vmul.f32 %v1292, 0.01
        %v1325 = vmul.f32 %v1293, 0.01
        %v1326 = vmul.f32 %v1294, 0.01
        %v1327 = vmul.f32 %v1295, 0.01
        %v1328 = vmul.f32 %v1296, 0.01
        %v1329 = vmul.f32 %v1297, 0.01
        %v1330 = vmul.f32 %v1298, 0.01
        %v1331 = vmul.f32 %v1299, 0.01
        %v1332 = vmul.f32 %v1300, 0.01
        %v1333 = vmul.f32 %v1301, 0.01
        %v1334 = vmul.f32 %v1302, 0.01
        %v1335 = vmul.f32 %v1303, 0.01
        %v1336 = vmul.f32 %v1304, 0.01
        %v1337 = vmul.f32 %v1305, 0.01
        %v1338 = vmul.f32 %v1306, 0.01
        %v1339 = vmul.f32 %v1307, 0.01
        %v1340 = vmul.f32 %v1308, 0.01
        %v1341 = vmul.f32 %v1309, 0.01
        %v1342 = vmul.f32 %v1310, 0.01
        %v1343 = vmul.f32 %v1311, 0.01
        %v1344 = vmul.f32 %v1312, 0.01
        %v1345 = vmul.f32 %v1313, 0.01
        %v1346 = vmul.f32 %v1314, 0.01
        %v1347 = vmul.f32 %v1315, 0.01
        %v1348 = vmul.f32 %v1316, 0.01
        %v1349 = vmul.f32 %v1317, 0.01
        %v1350 = vmul.f32 %v1318, 0.01
        %v1351 = vmul.f32 %v1319, 0.01
        %v1352 = vmul.f32 %v1320, 0.01
        %v1353 = vmul.f32 %v1321, 0.01
        %v1354 = vmax.f32 %v1290, %v1322
        %v1355 = vmax.f32 %v1291, %v1323
        %v1356 = vmax.f32 %v1292, %v1324
        %v1357 = vmax.f32 %v1293, %v1325
        %v1358 = vmax.f32 %v1294, %v1326
        %v1359 = vmax.f32 %v1295, %v1327
        %v1360 = vmax.f32 %v1296, %v1328
        %v1361 = vmax.f32 %v1297, %v1329
        %v1362 = vmax.f32 %v1298, %v1330
        %v1363 = vmax.f32 %v1299, %v1331
        %v1364 = vmax.f32 %v1300, %v1332
        %v1365 = vmax.f32 %v1301, %v1333
        %v1366 = vmax.f32 %v1302, %v1334
        %v1367 = vmax.f32 %v1303, %v1335
        %v1368 = vmax.f32 %v1304, %v1336
        %v1369 = vmax.f32 %v1305, %v1337
        %v1370 = vmax.f32 %v1306, %v1338
        %v1371 = vmax.f32 %v1307, %v1339
        %v1372 = vmax.f32 %v1308, %v1340
        %v1373 = vmax.f32 %v1309, %v1341
        %v1374 = vmax.f32 %v1310, %v1342
        %v1375 = vmax.f32 %v1311, %v1343
        %v1376 = vmax.f32 %v1312, %v1344
        %v1377 = vmax.f32 %v1313, %v1345
        %v1378 = vmax.f32 %v1314, %v1346
        %v1379 = vmax.f32 %v1315, %v1347
        %v1380 = vmax.f32 %v1316, %v1348
        %v1381 = vmax.f32 %v1317, %v1349
        %v1382 = vmax.f32 %v1318, %v1350
        %v1383 = vmax.f32 %v1319, %v1351
        %v1384 = vmax.f32 %v1320, %v1352
        %v1385 = vmax.f32 %v1321, %v1353
        %v1386 = vld [vmem:[%s5] sm:$0xff]
        %v1387 = vld [vmem:[%s5 + $0x8] sm:$0xff]
        %v1388 = vld [vmem:[%s5 + $0x10] sm:$0xff]
        %v1389 = vld [vmem:[%s5 + $0x18] sm:$0xff]
        %v1390 = vld [vmem:[%s5 + $0x20] sm:$0xff]
        %v1391 = vld [vmem:[%s5 + $0x28] sm:$0xff]
        %v1392 = vld [vmem:[%s5 + $0x30] sm:$0xff]
        %v1393 = vld [vmem:[%s5 + $0x38] sm:$0xff]
        %v1394 = vld [vmem:[%s5 + $0x40] sm:$0xff]
        %v1395 = vld [vmem:[%s5 + $0x48] sm:$0xff]
        %v1396 = vld [vmem:[%s5 + $0x50] sm:$0xff]
        %v1397 = vld [vmem:[%s5 + $0x58] sm:$0xff]
        %v1398 = vld [vmem:[%s5 + $0x60] sm:$0xff]
        %v1399 = vld [vmem:[%s5 + $0x68] sm:$0xff]
        %v1400 = vld [vmem:[%s5 + $0x70] sm:$0xff]
        %v1401 = vld [vmem:[%s5 + $0x78] sm:$0xff]
        %v1402 = vld [vmem:[%s5 + $0x80] sm:$0xff]
        %v1403 = vld [vmem:[%s5 + $0x88] sm:$0xff]
        %v1404 = vld [vmem:[%s5 + $0x90] sm:$0xff]
        %v1405 = vld [vmem:[%s5 + $0x98] sm:$0xff]
        %v1406 = vld [vmem:[%s5 + $0xa0] sm:$0xff]
        %v1407 = vld [vmem:[%s5 + $0xa8] sm:$0xff]
        %v1408 = vld [vmem:[%s5 + $0xb0] sm:$0xff]
        %v1409 = vld [vmem:[%s5 + $0xb8] sm:$0xff]
        %v1410 = vld [vmem:[%s5 + $0xc0] sm:$0xff]
        %v1411 = vld [vmem:[%s5 + $0xc8] sm:$0xff]
        %v1412 = vld [vmem:[%s5 + $0xd0] sm:$0xff]
        %v1413 = vld [vmem:[%s5 + $0xd8] sm:$0xff]
        %v1414 = vld [vmem:[%s5 + $0xe0] sm:$0xff]
        %v1415 = vld [vmem:[%s5 + $0xe8] sm:$0xff]
        %v1416 = vld [vmem:[%s5 + $0xf0] sm:$0xff]
        %v1417 = vld [vmem:[%s5 + $0xf8] sm:$0xff]
        %v1418 = vld [vmem:[%s5 + $0x100] sm:$0xff]
        %v1419 = vld [vmem:[%s5 + $0x108] sm:$0xff]
        %v1420 = vld [vmem:[%s5 + $0x110] sm:$0xff]
        %v1421 = vld [vmem:[%s5 + $0x118] sm:$0xff]
        %v1422 = vld [vmem:[%s5 + $0x120] sm:$0xff]
        %v1423 = vld [vmem:[%s5 + $0x128] sm:$0xff]
        %v1424 = vld [vmem:[%s5 + $0x130] sm:$0xff]
        %v1425 = vld [vmem:[%s5 + $0x138] sm:$0xff]
        %v1426 = vld [vmem:[%s5 + $0x140] sm:$0xff]
        %v1427 = vld [vmem:[%s5 + $0x148] sm:$0xff]
        %v1428 = vld [vmem:[%s5 + $0x150] sm:$0xff]
        %v1429 = vld [vmem:[%s5 + $0x158] sm:$0xff]
        %v1430 = vld [vmem:[%s5 + $0x160] sm:$0xff]
        %v1431 = vld [vmem:[%s5 + $0x168] sm:$0xff]
        %v1432 = vld [vmem:[%s5 + $0x170] sm:$0xff]
        %v1433 = vld [vmem:[%s5 + $0x178] sm:$0xff]
        %v1434 = vld [vmem:[%s5 + $0x180] sm:$0xff]
        %v1435 = vld [vmem:[%s5 + $0x188] sm:$0xff]
        %v1436 = vld [vmem:[%s5 + $0x190] sm:$0xff]
        %v1437 = vld [vmem:[%s5 + $0x198] sm:$0xff]
        %v1438 = vld [vmem:[%s5 + $0x1a0] sm:$0xff]
        %v1439 = vld [vmem:[%s5 + $0x1a8] sm:$0xff]
        %v1440 = vld [vmem:[%s5 + $0x1b0] sm:$0xff]
        %v1441 = vld [vmem:[%s5 + $0x1b8] sm:$0xff]
        %v1442 = vld [vmem:[%s5 + $0x1c0] sm:$0xff]
        %v1443 = vld [vmem:[%s5 + $0x1c8] sm:$0xff]
        %v1444 = vld [vmem:[%s5 + $0x1d0] sm:$0xff]
        %v1445 = vld [vmem:[%s5 + $0x1d8] sm:$0xff]
        %v1446 = vld [vmem:[%s5 + $0x1e0] sm:$0xff]
        %v1447 = vld [vmem:[%s5 + $0x1e8] sm:$0xff]
        %v1448 = vld [vmem:[%s5 + $0x1f0] sm:$0xff]
        %v1449 = vld [vmem:[%s5 + $0x1f8] sm:$0xff]
        %v1450 = vld [vmem:[%s6] sm:$0xff]
        %v1451 = vld [vmem:[%s6 + $0x8] sm:$0xff]
        %v1452 = vld [vmem:[%s6 + $0x10] sm:$0xff]
        %v1453 = vld [vmem:[%s6 + $0x18] sm:$0xff]
        %v1454 = vld [vmem:[%s6 + $0x20] sm:$0xff]
        %v1455 = vld [vmem:[%s6 + $0x28] sm:$0xff]
        %v1456 = vld [vmem:[%s6 + $0x30] sm:$0xff]
        %v1457 = vld [vmem:[%s6 + $0x38] sm:$0xff]
        %v1458 = vld [vmem:[%s6 + $0x40] sm:$0xff]
        %v1459 = vld [vmem:[%s6 + $0x48] sm:$0xff]
        %v1460 = vld [vmem:[%s6 + $0x50] sm:$0xff]
        %v1461 = vld [vmem:[%s6 + $0x58] sm:$0xff]
        %v1462 = vld [vmem:[%s6 + $0x60] sm:$0xff]
        %v1463 = vld [vmem:[%s6 + $0x68] sm:$0xff]
        %v1464 = vld [vmem:[%s6 + $0x70] sm:$0xff]
        %v1465 = vld [vmem:[%s6 + $0x78] sm:$0xff]
        %v1466 = vld [vmem:[%s6 + $0x80] sm:$0xff]
        %v1467 = vld [vmem:[%s6 + $0x88] sm:$0xff]
        %v1468 = vld [vmem:[%s6 + $0x90] sm:$0xff]
        %v1469 = vld [vmem:[%s6 + $0x98] sm:$0xff]
        %v1470 = vld [vmem:[%s6 + $0xa0] sm:$0xff]
        %v1471 = vld [vmem:[%s6 + $0xa8] sm:$0xff]
        %v1472 = vld [vmem:[%s6 + $0xb0] sm:$0xff]
        %v1473 = vld [vmem:[%s6 + $0xb8] sm:$0xff]
        %v1474 = vld [vmem:[%s6 + $0xc0] sm:$0xff]
        %v1475 = vld [vmem:[%s6 + $0xc8] sm:$0xff]
        %v1476 = vld [vmem:[%s6 + $0xd0] sm:$0xff]
        %v1477 = vld [vmem:[%s6 + $0xd8] sm:$0xff]
        %v1478 = vld [vmem:[%s6 + $0xe0] sm:$0xff]
        %v1479 = vld [vmem:[%s6 + $0xe8] sm:$0xff]
        %v1480 = vld [vmem:[%s6 + $0xf0] sm:$0xff]
        %v1481 = vld [vmem:[%s6 + $0xf8] sm:$0xff]
        %1483 = vset.pattern.permute.xlu0 0
        %1484 = vperm.xlu0 %1483, %v1450
        %v1485 = vpop.permute.xlu0 %1484
        %1488 = vset.pattern.permute.xlu0 0
        %1489 = vperm.xlu0 %1488, %v1451
        %v1490 = vpop.permute.xlu0 %1489
        %1493 = vset.pattern.permute.xlu0 0
        %1494 = vperm.xlu0 %1493, %v1452
        %v1495 = vpop.permute.xlu0 %1494
        %1498 = vset.pattern.permute.xlu0 0
        %1499 = vperm.xlu0 %1498, %v1453
        %v1500 = vpop.permute.xlu0 %1499
        %1503 = vset.pattern.permute.xlu0 0
        %1504 = vperm.xlu0 %1503, %v1454
        %v1505 = vpop.permute.xlu0 %1504
        %1508 = vset.pattern.permute.xlu0 0
        %1509 = vperm.xlu0 %1508, %v1455
        %v1510 = vpop.permute.xlu0 %1509
        %1513 = vset.pattern.permute.xlu0 0
        %1514 = vperm.xlu0 %1513, %v1456
        %v1515 = vpop.permute.xlu0 %1514
        %1518 = vset.pattern.permute.xlu0 0
        %1519 = vperm.xlu0 %1518, %v1457
        %v1520 = vpop.permute.xlu0 %1519
        %1523 = vset.pattern.permute.xlu0 0
        %1524 = vperm.xlu0 %1523, %v1458
        %v1525 = vpop.permute.xlu0 %1524
        %1528 = vset.pattern.permute.xlu0 0
        %1529 = vperm.xlu0 %1528, %v1459
        %v1530 = vpop.permute.xlu0 %1529
        %1533 = vset.pattern.permute.xlu0 0
        %1534 = vperm.xlu0 %1533, %v1460
        %v1535 = vpop.permute.xlu0 %1534
        %1538 = vset.pattern.permute.xlu0 0
        %1539 = vperm.xlu0 %1538, %v1461
        %v1540 = vpop.permute.xlu0 %1539
        %1543 = vset.pattern.permute.xlu0 0
        %1544 = vperm.xlu0 %1543, %v1462
        %v1545 = vpop.permute.xlu0 %1544
        %1548 = vset.pattern.permute.xlu0 0
        %1549 = vperm.xlu0 %1548, %v1463
        %v1550 = vpop.permute.xlu0 %1549
        %1553 = vset.pattern.permute.xlu0 0
        %1554 = vperm.xlu0 %1553, %v1464
        %v1555 = vpop.permute.xlu0 %1554
        %1558 = vset.pattern.permute.xlu0 0
        %1559 = vperm.xlu0 %1558, %v1465
        %v1560 = vpop.permute.xlu0 %1559
        %1563 = vset.pattern.permute.xlu0 0
        %1564 = vperm.xlu0 %1563, %v1466
        %v1565 = vpop.permute.xlu0 %1564
        %1568 = vset.pattern.permute.xlu0 0
        %1569 = vperm.xlu0 %1568, %v1467
        %v1570 = vpop.permute.xlu0 %1569
        %1573 = vset.pattern.permute.xlu0 0
        %1574 = vperm.xlu0 %1573, %v1468
        %v1575 = vpop.permute.xlu0 %1574
        %1578 = vset.pattern.permute.xlu0 0
        %1579 = vperm.xlu0 %1578, %v1469
        %v1580 = vpop.permute.xlu0 %1579
        %1583 = vset.pattern.permute.xlu0 0
        %1584 = vperm.xlu0 %1583, %v1470
        %v1585 = vpop.permute.xlu0 %1584
        %1588 = vset.pattern.permute.xlu0 0
        %1589 = vperm.xlu0 %1588, %v1471
        %v1590 = vpop.permute.xlu0 %1589
        %1593 = vset.pattern.permute.xlu0 0
        %1594 = vperm.xlu0 %1593, %v1472
        %v1595 = vpop.permute.xlu0 %1594
        %1598 = vset.pattern.permute.xlu0 0
        %1599 = vperm.xlu0 %1598, %v1473
        %v1600 = vpop.permute.xlu0 %1599
        %1603 = vset.pattern.permute.xlu0 0
        %1604 = vperm.xlu0 %1603, %v1474
        %v1605 = vpop.permute.xlu0 %1604
        %1608 = vset.pattern.permute.xlu0 0
        %1609 = vperm.xlu0 %1608, %v1475
        %v1610 = vpop.permute.xlu0 %1609
        %1613 = vset.pattern.permute.xlu0 0
        %1614 = vperm.xlu0 %1613, %v1476
        %v1615 = vpop.permute.xlu0 %1614
        %1618 = vset.pattern.permute.xlu0 0
        %1619 = vperm.xlu0 %1618, %v1477
        %v1620 = vpop.permute.xlu0 %1619
        %1623 = vset.pattern.permute.xlu0 0
        %1624 = vperm.xlu0 %1623, %v1478
        %v1625 = vpop.permute.xlu0 %1624
        %1628 = vset.pattern.permute.xlu0 0
        %1629 = vperm.xlu0 %1628, %v1479
        %v1630 = vpop.permute.xlu0 %1629
        %1633 = vset.pattern.permute.xlu0 0
        %1634 = vperm.xlu0 %1633, %v1480
        %v1635 = vpop.permute.xlu0 %1634
        %1638 = vset.pattern.permute.xlu0 0
        %1639 = vperm.xlu0 %1638, %v1481
        %v1640 = vpop.permute.xlu0 %1639
        %1642 = vmatprep.subr.mxu0 0.0
        %1643 = vmatpush1.msra.mxu0 %v1354
        %1644 = vmatprep.subr.mxu0 0.0
        %1645 = vmatpush1.msra.mxu0 %v1355
        %1646 = vmatprep.subr.mxu0 0.0
        %1647 = vmatpush1.msra.mxu0 %v1356
        %1648 = vmatprep.subr.mxu0 0.0
        %1649 = vmatpush1.msra.mxu0 %v1357
        %1650 = vmatprep.subr.mxu0 0.0
        %1651 = vmatpush1.msra.mxu0 %v1358
        %1652 = vmatprep.subr.mxu0 0.0
        %1653 = vmatpush1.msra.mxu0 %v1359
        %1654 = vmatprep.subr.mxu0 0.0
        %1655 = vmatpush1.msra.mxu0 %v1360
        %1656 = vmatprep.subr.mxu0 0.0
        %1657 = vmatpush1.msra.mxu0 %v1361
        %1658 = vmatprep.subr.mxu0 0.0
        %1659 = vmatpush1.msra.mxu0 %v1362
        %1660 = vmatprep.subr.mxu0 0.0
        %1661 = vmatpush1.msra.mxu0 %v1363
        %1662 = vmatprep.subr.mxu0 0.0
        %1663 = vmatpush1.msra.mxu0 %v1364
        %1664 = vmatprep.subr.mxu0 0.0
        %1665 = vmatpush1.msra.mxu0 %v1365
        %1666 = vmatprep.subr.mxu0 0.0
        %1667 = vmatpush1.msra.mxu0 %v1366
        %1668 = vmatprep.subr.mxu0 0.0
        %1669 = vmatpush1.msra.mxu0 %v1367
        %1670 = vmatprep.subr.mxu0 0.0
        %1671 = vmatpush1.msra.mxu0 %v1368
        %1672 = vmatprep.subr.mxu0 0.0
        %1673 = vmatpush1.msra.mxu0 %v1369
        %1674 = vmatprep.subr.mxu0 0.0
        %1675 = vmatpush1.msra.mxu0 %v1370
        %1676 = vmatprep.subr.mxu0 0.0
        %1677 = vmatpush1.msra.mxu0 %v1371
        %1678 = vmatprep.subr.mxu0 0.0
        %1679 = vmatpush1.msra.mxu0 %v1372
        %1680 = vmatprep.subr.mxu0 0.0
        %1681 = vmatpush1.msra.mxu0 %v1373
        %1682 = vmatprep.subr.mxu0 0.0
        %1683 = vmatpush1.msra.mxu0 %v1374
        %1684 = vmatprep.subr.mxu0 0.0
        %1685 = vmatpush1.msra.mxu0 %v1375
        %1686 = vmatprep.subr.mxu0 0.0
        %1687 = vmatpush1.msra.mxu0 %v1376
        %1688 = vmatprep.subr.mxu0 0.0
        %1689 = vmatpush1.msra.mxu0 %v1377
        %1690 = vmatprep.subr.mxu0 0.0
        %1691 = vmatpush1.msra.mxu0 %v1378
        %1692 = vmatprep.subr.mxu0 0.0
        %1693 = vmatpush1.msra.mxu0 %v1379
        %1694 = vmatprep.subr.mxu0 0.0
        %1695 = vmatpush1.msra.mxu0 %v1380
        %1696 = vmatprep.subr.mxu0 0.0
        %1697 = vmatpush1.msra.mxu0 %v1381
        %1698 = vmatprep.subr.mxu0 0.0
        %1699 = vmatpush1.msra.mxu0 %v1382
        %1700 = vmatprep.subr.mxu0 0.0
        %1701 = vmatpush1.msra.mxu0 %v1383
        %1702 = vmatprep.subr.mxu0 0.0
        %1703 = vmatpush1.msra.mxu0 %v1384
        %1704 = vmatprep.subr.mxu0 0.0
        %1705 = vmatpush1.msra.mxu0 %v1385
        %1706 = vmatprep.mubr.f32.mxu0 %v1387
        %1707 = vmatmul.mubr.f32.gmra.mrb[0].mxu0 %v1386
        %v1708 = vpop.f32.mrb[0].mxu0
        %v1709 = vadd.f32 %v1485, %v1708
        %v1710 = vpop.f32.mrb[0].mxu0
        %1711 = vmatprep.mubr.f32.mxu0 %v1389
        %1712 = vmatmul.mubr.f32.gmra.mrb[0].mxu0 %v1388
        %v1713 = vpop.f32.mrb[0].mxu0
        %v1714 = vadd.f32 %v1490, %v1713
        %v1715 = vpop.f32.mrb[0].mxu0
        %1716 = vmatprep.mubr.f32.mxu0 %v1391
        %1717 = vmatmul.mubr.f32.gmra.mrb[0].mxu0 %v1390
        %v1718 = vpop.f32.mrb[0].mxu0
        %v1719 = vadd.f32 %v1495, %v1718
        %v1720 = vpop.f32.mrb[0].mxu0
        %1721 = vmatprep.mubr.f32.mxu0 %v1393
        %1722 = vmatmul.mubr.f32.gmra.mrb[0].mxu0 %v1392
        %v1723 = vpop.f32.mrb[0].mxu0
        %v1724 = vadd.f32 %v1500, %v1723
        %v1725 = vpop.f32.mrb[0].mxu0
        %1726 = vmatprep.mubr.f32.mxu0 %v1395
        %1727 = vmatmul.mubr.f32.gmra.mrb[0].mxu0 %v1394
        %v1728 = vpop.f32.mrb[0].mxu0
        %v1729 = vadd.f32 %v1505, %v1728
        %v1730 = vpop.f32.mrb[0].mxu0
        %1731 = vmatprep.mubr.f32.mxu0 %v1397
        %1732 = vmatmul.mubr.f32.gmra.mrb[0].mxu0 %v1396
        %v1733 = vpop.f32.mrb[0].mxu0
        %v1734 = vadd.f32 %v1510, %v1733
        %v1735 = vpop.f32.mrb[0].mxu0
        %1736 = vmatprep.mubr.f32.mxu0 %v1399
        %1737 = vmatmul.mubr.f32.gmra.mrb[0].mxu0 %v1398
        %v1738 = vpop.f32.mrb[0].mxu0
        %v1739 = vadd.f32 %v1515, %v1738
        %v1740 = vpop.f32.mrb[0].mxu0
        %1741 = vmatprep.mubr.f32.mxu0 %v1401
        %1742 = vmatmul.mubr.f32.gmra.mrb[0].mxu0 %v1400
        %v1743 = vpop.f32.mrb[0].mxu0
        %v1744 = vadd.f32 %v1520, %v1743
        %v1745 = vpop.f32.mrb[0].mxu0
        %1746 = vmatprep.mubr.f32.mxu0 %v1403
        %1747 = vmatmul.mubr.f32.gmra.mrb[0].mxu0 %v1402
        %v1748 = vpop.f32.mrb[0].mxu0
        %v1749 = vadd.f32 %v1525, %v1748
        %v1750 = vpop.f32.mrb[0].mxu0
        %1751 = vmatprep.mubr.f32.mxu0 %v1405
        %1752 = vmatmul.mubr.f32.gmra.mrb[0].mxu0 %v1404
        %v1753 = vpop.f32.mrb[0].mxu0
        %v1754 = vadd.f32 %v1530, %v1753
        %v1755 = vpop.f32.mrb[0].mxu0
        %1756 = vmatprep.mubr.f32.mxu0 %v1407
        %1757 = vmatmul.mubr.f32.gmra.mrb[0].mxu0 %v1406
        %v1758 = vpop.f32.mrb[0].mxu0
        %v1759 = vadd.f32 %v1535, %v1758
        %v1760 = vpop.f32.mrb[0].mxu0
        %1761 = vmatprep.mubr.f32.mxu0 %v1409
        %1762 = vmatmul.mubr.f32.gmra.mrb[0].mxu0 %v1408
        %v1763 = vpop.f32.mrb[0].mxu0
        %v1764 = vadd.f32 %v1540, %v1763
        %v1765 = vpop.f32.mrb[0].mxu0
        %1766 = vmatprep.mubr.f32.mxu0 %v1411
        %1767 = vmatmul.mubr.f32.gmra.mrb[0].mxu0 %v1410
        %v1768 = vpop.f32.mrb[0].mxu0
        %v1769 = vadd.f32 %v1545, %v1768
        %v1770 = vpop.f32.mrb[0].mxu0
        %1771 = vmatprep.mubr.f32.mxu0 %v1413
        %1772 = vmatmul.mubr.f32.gmra.mrb[0].mxu0 %v1412
        %v1773 = vpop.f32.mrb[0].mxu0
        %v1774 = vadd.f32 %v1550, %v1773
        %v1775 = vpop.f32.mrb[0].mxu0
        %1776 = vmatprep.mubr.f32.mxu0 %v1415
        %1777 = vmatmul.mubr.f32.gmra.mrb[0].mxu0 %v1414
        %v1778 = vpop.f32.mrb[0].mxu0
        %v1779 = vadd.f32 %v1555, %v1778
        %v1780 = vpop.f32.mrb[0].mxu0
        %1781 = vmatprep.mubr.f32.mxu0 %v1417
        %1782 = vmatmul.mubr.f32.gmra.mrb[0].mxu0 %v1416
        %v1783 = vpop.f32.mrb[0].mxu0
        %v1784 = vadd.f32 %v1560, %v1783
        %v1785 = vpop.f32.mrb[0].mxu0
        %1786 = vmatprep.mubr.f32.mxu0 %v1419
        %1787 = vmatmul.mubr.f32.gmra.mrb[0].mxu0 %v1418
        %v1788 = vpop.f32.mrb[0].mxu0
        %v1789 = vadd.f32 %v1565, %v1788
        %v1790 = vpop.f32.mrb[0].mxu0
        %1791 = vmatprep.mubr.f32.mxu0 %v1421
        %1792 = vmatmul.mubr.f32.gmra.mrb[0].mxu0 %v1420
        %v1793 = vpop.f32.mrb[0].mxu0
        %v1794 = vadd.f32 %v1570, %v1793
        %v1795 = vpop.f32.mrb[0].mxu0
        %1796 = vmatprep.mubr.f32.mxu0 %v1423
        %1797 = vmatmul.mubr.f32.gmra.mrb[0].mxu0 %v1422
        %v1798 = vpop.f32.mrb[0].mxu0
        %v1799 = vadd.f32 %v1575, %v1798
        %v1800 = vpop.f32.mrb[0].mxu0
        %1801 = vmatprep.mubr.f32.mxu0 %v1425
        %1802 = vmatmul.mubr.f32.gmra.mrb[0].mxu0 %v1424
        %v1803 = vpop.f32.mrb[0].mxu0
        %v1804 = vadd.f32 %v1580, %v1803
        %v1805 = vpop.f32.mrb[0].mxu0
        %1806 = vmatprep.mubr.f32.mxu0 %v1427
        %1807 = vmatmul.mubr.f32.gmra.mrb[0].mxu0 %v1426
        %v1808 = vpop.f32.mrb[0].mxu0
        %v1809 = vadd.f32 %v1585, %v1808
        %v1810 = vpop.f32.mrb[0].mxu0
        %1811 = vmatprep.mubr.f32.mxu0 %v1429
        %1812 = vmatmul.mubr.f32.gmra.mrb[0].mxu0 %v1428
        %v1813 = vpop.f32.mrb[0].mxu0
        %v1814 = vadd.f32 %v1590, %v1813
        %v1815 = vpop.f32.mrb[0].mxu0
        %1816 = vmatprep.mubr.f32.mxu0 %v1431
        %1817 = vmatmul.mubr.f32.gmra.mrb[0].mxu0 %v1430
        %v1818 = vpop.f32.mrb[0].mxu0
        %v1819 = vadd.f32 %v1595, %v1818
        %v1820 = vpop.f32.mrb[0].mxu0
        %1821 = vmatprep.mubr.f32.mxu0 %v1433
        %1822 = vmatmul.mubr.f32.gmra.mrb[0].mxu0 %v1432
        %v1823 = vpop.f32.mrb[0].mxu0
        %v1824 = vadd.f32 %v1600, %v1823
        %v1825 = vpop.f32.mrb[0].mxu0
        %1826 = vmatprep.mubr.f32.mxu0 %v1435
        %1827 = vmatmul.mubr.f32.gmra.mrb[0].mxu0 %v1434
        %v1828 = vpop.f32.mrb[0].mxu0
        %v1829 = vadd.f32 %v1605, %v1828
        %v1830 = vpop.f32.mrb[0].mxu0
        %1831 = vmatprep.mubr.f32.mxu0 %v1437
        %1832 = vmatmul.mubr.f32.gmra.mrb[0].mxu0 %v1436
        %v1833 = vpop.f32.mrb[0].mxu0
        %v1834 = vadd.f32 %v1610, %v1833
        %v1835 = vpop.f32.mrb[0].mxu0
        %1836 = vmatprep.mubr.f32.mxu0 %v1439
        %1837 = vmatmul.mubr.f32.gmra.mrb[0].mxu0 %v1438
        %v1838 = vpop.f32.mrb[0].mxu0
        %v1839 = vadd.f32 %v1615, %v1838
        %v1840 = vpop.f32.mrb[0].mxu0
        %1841 = vmatprep.mubr.f32.mxu0 %v1441
        %1842 = vmatmul.mubr.f32.gmra.mrb[0].mxu0 %v1440
        %v1843 = vpop.f32.mrb[0].mxu0
        %v1844 = vadd.f32 %v1620, %v1843
        %v1845 = vpop.f32.mrb[0].mxu0
        %1846 = vmatprep.mubr.f32.mxu0 %v1443
        %1847 = vmatmul.mubr.f32.gmra.mrb[0].mxu0 %v1442
        %v1848 = vpop.f32.mrb[0].mxu0
        %v1849 = vadd.f32 %v1625, %v1848
        %v1850 = vpop.f32.mrb[0].mxu0
        %1851 = vmatprep.mubr.f32.mxu0 %v1445
        %1852 = vmatmul.mubr.f32.gmra.mrb[0].mxu0 %v1444
        %v1853 = vpop.f32.mrb[0].mxu0
        %v1854 = vadd.f32 %v1630, %v1853
        %v1855 = vpop.f32.mrb[0].mxu0
        %1856 = vmatprep.mubr.f32.mxu0 %v1447
        %1857 = vmatmul.mubr.f32.gmra.mrb[0].mxu0 %v1446
        %v1858 = vpop.f32.mrb[0].mxu0
        %v1859 = vadd.f32 %v1635, %v1858
        %v1860 = vpop.f32.mrb[0].mxu0
        %1861 = vmatprep.mubr.f32.mxu0 %v1449
        %1862 = vmatmul.mubr.f32.gmra.mrb[0].mxu0 %v1448
        %v1863 = vpop.f32.mrb[0].mxu0
        %v1864 = vadd.f32 %v1640, %v1863
        %v1865 = vpop.f32.mrb[0].mxu0
        %1866 = vdwg.mxu0
        %v1867 = vmul.f32 %v1709, 0.01
        %v1868 = vmul.f32 %v1714, 0.01
        %v1869 = vmul.f32 %v1719, 0.01
        %v1870 = vmul.f32 %v1724, 0.01
        %v1871 = vmul.f32 %v1729, 0.01
        %v1872 = vmul.f32 %v1734, 0.01
        %v1873 = vmul.f32 %v1739, 0.01
        %v1874 = vmul.f32 %v1744, 0.01
        %v1875 = vmul.f32 %v1749, 0.01
        %v1876 = vmul.f32 %v1754, 0.01
        %v1877 = vmul.f32 %v1759, 0.01
        %v1878 = vmul.f32 %v1764, 0.01
        %v1879 = vmul.f32 %v1769, 0.01
        %v1880 = vmul.f32 %v1774, 0.01
        %v1881 = vmul.f32 %v1779, 0.01
        %v1882 = vmul.f32 %v1784, 0.01
        %v1883 = vmul.f32 %v1789, 0.01
        %v1884 = vmul.f32 %v1794, 0.01
        %v1885 = vmul.f32 %v1799, 0.01
        %v1886 = vmul.f32 %v1804, 0.01
        %v1887 = vmul.f32 %v1809, 0.01
        %v1888 = vmul.f32 %v1814, 0.01
        %v1889 = vmul.f32 %v1819, 0.01
        %v1890 = vmul.f32 %v1824, 0.01
        %v1891 = vmul.f32 %v1829, 0.01
        %v1892 = vmul.f32 %v1834, 0.01
        %v1893 = vmul.f32 %v1839, 0.01
        %v1894 = vmul.f32 %v1844, 0.01
        %v1895 = vmul.f32 %v1849, 0.01
        %v1896 = vmul.f32 %v1854, 0.01
        %v1897 = vmul.f32 %v1859, 0.01
        %v1898 = vmul.f32 %v1864, 0.01
        %v1899 = vmax.f32 %v1709, %v1867
        %v1900 = vmax.f32 %v1714, %v1868
        %v1901 = vmax.f32 %v1719, %v1869
        %v1902 = vmax.f32 %v1724, %v1870
        %v1903 = vmax.f32 %v1729, %v1871
        %v1904 = vmax.f32 %v1734, %v1872
        %v1905 = vmax.f32 %v1739, %v1873
        %v1906 = vmax.f32 %v1744, %v1874
        %v1907 = vmax.f32 %v1749, %v1875
        %v1908 = vmax.f32 %v1754, %v1876
        %v1909 = vmax.f32 %v1759, %v1877
        %v1910 = vmax.f32 %v1764, %v1878
        %v1911 = vmax.f32 %v1769, %v1879
        %v1912 = vmax.f32 %v1774, %v1880
        %v1913 = vmax.f32 %v1779, %v1881
        %v1914 = vmax.f32 %v1784, %v1882
        %v1915 = vmax.f32 %v1789, %v1883
        %v1916 = vmax.f32 %v1794, %v1884
        %v1917 = vmax.f32 %v1799, %v1885
        %v1918 = vmax.f32 %v1804, %v1886
        %v1919 = vmax.f32 %v1809, %v1887
        %v1920 = vmax.f32 %v1814, %v1888
        %v1921 = vmax.f32 %v1819, %v1889
        %v1922 = vmax.f32 %v1824, %v1890
        %v1923 = vmax.f32 %v1829, %v1891
        %v1924 = vmax.f32 %v1834, %v1892
        %v1925 = vmax.f32 %v1839, %v1893
        %v1926 = vmax.f32 %v1844, %v1894
        %v1927 = vmax.f32 %v1849, %v1895
        %v1928 = vmax.f32 %v1854, %v1896
        %v1929 = vmax.f32 %v1859, %v1897
        %v1930 = vmax.f32 %v1864, %v1898
        %v1931 = vld [vmem:[%s7] sm:$0xff]
        %v1932 = vld [vmem:[%s7 + $0x8] sm:$0xff]
        %v1933 = vld [vmem:[%s7 + $0x10] sm:$0xff]
        %v1934 = vld [vmem:[%s7 + $0x18] sm:$0xff]
        %v1935 = vld [vmem:[%s7 + $0x20] sm:$0xff]
        %v1936 = vld [vmem:[%s7 + $0x28] sm:$0xff]
        %v1937 = vld [vmem:[%s7 + $0x30] sm:$0xff]
        %v1938 = vld [vmem:[%s7 + $0x38] sm:$0xff]
        %v1939 = vld [vmem:[%s8] sm:$0xff]
        %v1940 = vld [vmem:[%s8 + $0x8] sm:$0xff]
        %v1941 = vld [vmem:[%s8 + $0x10] sm:$0xff]
        %v1942 = vld [vmem:[%s8 + $0x18] sm:$0xff]
        %1944 = vset.pattern.permute.xlu0 0
        %1945 = vperm.xlu0 %1944, %v1939
        %v1946 = vpop.permute.xlu0 %1945
        %1949 = vset.pattern.permute.xlu0 0
        %1950 = vperm.xlu0 %1949, %v1940
        %v1951 = vpop.permute.xlu0 %1950
        %1954 = vset.pattern.permute.xlu0 0
        %1955 = vperm.xlu0 %1954, %v1941
        %v1956 = vpop.permute.xlu0 %1955
        %1959 = vset.pattern.permute.xlu0 0
        %1960 = vperm.xlu0 %1959, %v1942
        %v1961 = vpop.permute.xlu0 %1960
        %1963 = vmatprep.subr.mxu0 0.0
        %1964 = vmatpush1.msra.mxu0 %v1899
        %1965 = vmatprep.subr.mxu0 0.0
        %1966 = vmatpush1.msra.mxu0 %v1900
        %1967 = vmatprep.subr.mxu0 0.0
        %1968 = vmatpush1.msra.mxu0 %v1901
        %1969 = vmatprep.subr.mxu0 0.0
        %1970 = vmatpush1.msra.mxu0 %v1902
        %1971 = vmatprep.subr.mxu0 0.0
        %1972 = vmatpush1.msra.mxu0 %v1903
        %1973 = vmatprep.subr.mxu0 0.0
        %1974 = vmatpush1.msra.mxu0 %v1904
        %1975 = vmatprep.subr.mxu0 0.0
        %1976 = vmatpush1.msra.mxu0 %v1905
        %1977 = vmatprep.subr.mxu0 0.0
        %1978 = vmatpush1.msra.mxu0 %v1906
        %1979 = vmatprep.subr.mxu0 0.0
        %1980 = vmatpush1.msra.mxu0 %v1907
        %1981 = vmatprep.subr.mxu0 0.0
        %1982 = vmatpush1.msra.mxu0 %v1908
        %1983 = vmatprep.subr.mxu0 0.0
        %1984 = vmatpush1.msra.mxu0 %v1909
        %1985 = vmatprep.subr.mxu0 0.0
        %1986 = vmatpush1.msra.mxu0 %v1910
        %1987 = vmatprep.subr.mxu0 0.0
        %1988 = vmatpush1.msra.mxu0 %v1911
        %1989 = vmatprep.subr.mxu0 0.0
        %1990 = vmatpush1.msra.mxu0 %v1912
        %1991 = vmatprep.subr.mxu0 0.0
        %1992 = vmatpush1.msra.mxu0 %v1913
        %1993 = vmatprep.subr.mxu0 0.0
        %1994 = vmatpush1.msra.mxu0 %v1914
        %1995 = vmatprep.subr.mxu0 0.0
        %1996 = vmatpush1.msra.mxu0 %v1915
        %1997 = vmatprep.subr.mxu0 0.0
        %1998 = vmatpush1.msra.mxu0 %v1916
        %1999 = vmatprep.subr.mxu0 0.0
        %2000 = vmatpush1.msra.mxu0 %v1917
        %2001 = vmatprep.subr.mxu0 0.0
        %2002 = vmatpush1.msra.mxu0 %v1918
        %2003 = vmatprep.subr.mxu0 0.0
        %2004 = vmatpush1.msra.mxu0 %v1919
        %2005 = vmatprep.subr.mxu0 0.0
        %2006 = vmatpush1.msra.mxu0 %v1920
        %2007 = vmatprep.subr.mxu0 0.0
        %2008 = vmatpush1.msra.mxu0 %v1921
        %2009 = vmatprep.subr.mxu0 0.0
        %2010 = vmatpush1.msra.mxu0 %v1922
        %2011 = vmatprep.subr.mxu0 0.0
        %2012 = vmatpush1.msra.mxu0 %v1923
        %2013 = vmatprep.subr.mxu0 0.0
        %2014 = vmatpush1.msra.mxu0 %v1924
        %2015 = vmatprep.subr.mxu0 0.0
        %2016 = vmatpush1.msra.mxu0 %v1925
        %2017 = vmatprep.subr.mxu0 0.0
        %2018 = vmatpush1.msra.mxu0 %v1926
        %2019 = vmatprep.subr.mxu0 0.0
        %2020 = vmatpush1.msra.mxu0 %v1927
        %2021 = vmatprep.subr.mxu0 0.0
        %2022 = vmatpush1.msra.mxu0 %v1928
        %2023 = vmatprep.subr.mxu0 0.0
        %2024 = vmatpush1.msra.mxu0 %v1929
        %2025 = vmatprep.subr.mxu0 0.0
        %2026 = vmatpush1.msra.mxu0 %v1930
        %2027 = vmatprep.mubr.f32.mxu0 %v1932
        %2028 = vmatmul.mubr.f32.gmra.mrb[0].mxu0 %v1931
        %v2029 = vpop.f32.mrb[0].mxu0
        %v2030 = vadd.f32 %v1946, %v2029
        %v2031 = vpop.f32.mrb[0].mxu0
        %2032 = vmatprep.mubr.f32.mxu0 %v1934
        %2033 = vmatmul.mubr.f32.gmra.mrb[0].mxu0 %v1933
        %v2034 = vpop.f32.mrb[0].mxu0
        %v2035 = vadd.f32 %v1951, %v2034
        %v2036 = vpop.f32.mrb[0].mxu0
        %2037 = vmatprep.mubr.f32.mxu0 %v1936
        %2038 = vmatmul.mubr.f32.gmra.mrb[0].mxu0 %v1935
        %v2039 = vpop.f32.mrb[0].mxu0
        %v2040 = vadd.f32 %v1956, %v2039
        %v2041 = vpop.f32.mrb[0].mxu0
        %2042 = vmatprep.mubr.f32.mxu0 %v1938
        %2043 = vmatmul.mubr.f32.gmra.mrb[0].mxu0 %v1937
        %v2044 = vpop.f32.mrb[0].mxu0
        %v2045 = vadd.f32 %v1961, %v2044
        %v2046 = vpop.f32.mrb[0].mxu0
        %2047 = vdwg.mxu0
        %2048 = vst.msk [vmem:[%s370] sm:$0xff] %vm455, %v2030
        %2049 = vst.msk [vmem:[%s370 + $0x8] sm:$0xff] %vm455, %v2035
        %2050 = vst.msk [vmem:[%s370 + $0x10] sm:$0xff] %vm455, %v2040
        %2051 = vst.msk [vmem:[%s370 + $0x18] sm:$0xff] %vm455, %v2045
        %s2052 = sand.u32 %s248, 1
        %s2053 = scalar_lea.sflag [#allocation3], %s2052
        %s2054 = sand.u32 %s248, 1
        %s2055 = smul.addr %s2054, 32
        %s2056 = scalar_lea.vmem [#allocation2], %s2055
        // Predicated region
        $region57: #{spatial_map_forward.1} parent=55 // pred_check
          %p2057 = pneg %p258
        $region58: #{spatial_map_forward.1} parent=55 // pred_check_branch
          %2059 = sbr.rel (%p2057) target = $region60
        $region59: #{spatial_map_forward.1} parent=55 // pred_region
          %s2061 = ssub.s32 512, 512
          %2062 = vsyncadd %s2053, %s2061
          %s2063 = smul.addr %s27, 4
          %s2064 = sadd.s32 %s28, %s2063
          %s2065 = smul.addr %s2064, 128
          %s2066 = scalar_lea.hbm %s9, %s2065
          %s2067 = sshll.u32 %s2056, 4
          %s2068 = int_to_ptr.vmem [resolvable:$true] %s2067
          %2073 = dma.vmem_to_hbm [thread:$0]  %s2068, 512, %s2066, %s2053, 128, 128, 8
        $region60: #{spatial_map_forward.1} parent=55 // pred_fallthru
          _
      $region56: #{spatial_map_forward.1} parent=5 // pred_fallthru
        _
      %p2074 = scmp.le.s32.totalorder 2, %s18
      // Predicated region
      $region61: #{spatial_map_forward.1} parent=5 // pred_check
        %p2075 = pneg %p2074
      $region62: #{spatial_map_forward.1} parent=5 // pred_check_branch
        %2077 = sbr.rel (%p2075) target = $region64
      $region63: #{spatial_map_forward.1} parent=5 // pred_region
        %s2078 = ssub.s32 %s18, 2
        // Predicated region
        $region65: #{spatial_map_forward.1} parent=63 // pred_check
          %p2079 = pneg %p264
        $region66: #{spatial_map_forward.1} parent=63 // pred_check_branch
          %2081 = sbr.rel (%p2079) target = $region68
        $region67: #{spatial_map_forward.1} parent=63 // pred_region
          %s2082 = sand.u32 %s249, 1
          %s2083 = scalar_lea.sflag [#allocation3], %s2082
          %s2084 = sand.u32 %s249, 1
          %s2085 = smul.addr %s2084, 32
          %s2086 = scalar_lea.vmem [#allocation2], %s2085
          %2087 = dma.done %s2083, 512
        $region68: #{spatial_map_forward.1} parent=63 // pred_fallthru
          _
      $region64: #{spatial_map_forward.1} parent=5 // pred_fallthru
        _
    $region6: #{spatial_map_forward.1} parent=1 // loop_footer
      %s22 = sadd.s32 1, %s18
    $region7: #{spatial_map_forward.1} parent=1 // loop_footer_branch
      %17 = sbr.rel target = $region3
    $region8: #{spatial_map_forward.1} parent=1 // loop_exit
      _
    %2088 = vsyncpa [#allocation3], 1
    %s2089 = scalar_lea.sflag [#allocation3], 1
    %2090 = vsyncpa %s2089, 1

</llo_original>
